<compile_context>
chip_gen: v6e
topology: v6e:2x2x1
jax: 0.10.0
libtpu: 0.0.40
codegen_flags: <defaults>
</compile_context>

<pallas_src>
import functools

import jax
import jax.numpy as jnp
from jax.experimental import pallas as pl
from jax.experimental.pallas import tpu as pltpu

HID = 256  # fixed by the module (Linear(256, 256), Linear(512, 256))


def cross_interaction_kernel(
    xs_ref, xg_ref,
    w0a_ref, b0a_ref, w0b_ref, b0b_ref,
    w1a_ref, b1a_ref, w1b_ref, b1b_ref,
    wls_ref, wlg_ref, bl_ref,
    o_ref,
):
    xs = xs_ref[...]                       # (TM, 256) f32
    xg = xg_ref[...]                       # (TM, 256) f32
    xs_bf = xs.astype(jnp.bfloat16)        # MXU operands in bf16 (reused twice)
    xg_bf = xg.astype(jnp.bfloat16)

    # crossInteraction0(x_graph): Linear -> ReLU -> Linear   (bf16 in, f32 acc)
    h0 = jnp.dot(xg_bf, w0a_ref[...], preferred_element_type=jnp.float32)
    h0 = jnp.maximum(h0 + b0a_ref[...], 0.0)
    h0 = jnp.dot(h0.astype(jnp.bfloat16), w0b_ref[...],
                 preferred_element_type=jnp.float32) + b0b_ref[...]
    # CI0 = tanh(einsum('bij,bij->bi', MLP0(x_graph), x_seq)) + 1   (f32)
    ci0 = jnp.tanh(jnp.sum(h0 * xs, axis=-1, keepdims=True)) + 1.0   # (TM, 1)

    # crossInteraction1(x_seq): Linear -> ReLU -> Linear
    h1 = jnp.dot(xs_bf, w1a_ref[...], preferred_element_type=jnp.float32)
    h1 = jnp.maximum(h1 + b1a_ref[...], 0.0)
    h1 = jnp.dot(h1.astype(jnp.bfloat16), w1b_ref[...],
                 preferred_element_type=jnp.float32) + b1b_ref[...]
    ci1 = jnp.tanh(jnp.sum(h1 * xg, axis=-1, keepdims=True)) + 1.0   # (TM, 1)

    # concat along hidden + Linear(512, 256) == two K=256 matmuls.  The per-row
    # CI scale commutes with the matmul, so apply it to the f32 accumulators.
    out = (
        ci0 * jnp.dot(xs_bf, wls_ref[...], preferred_element_type=jnp.float32)
        + ci1 * jnp.dot(xg_bf, wlg_ref[...], preferred_element_type=jnp.float32)
        + bl_ref[...]
    )
    o_ref[...] = out.astype(o_ref.dtype)


def _round_up(x, m):
    return (x + m - 1) // m * m


@functools.partial(jax.jit, static_argnames=("tile_m",))
def cross_interaction(x_seq, x_graph, params, tile_m=512):
    B, N, H = x_seq.shape
    assert H == HID
    rows = B * N

    # Flatten (B, N) -> rows so the MXU M dimension is tile_m, not N-limited.
    tile_m = _round_up(min(tile_m, _round_up(rows, 8)), 8)
    m_pad = _round_up(rows, tile_m)
    xs2 = x_seq.reshape(rows, HID)
    xg2 = x_graph.reshape(rows, HID)
    if m_pad != rows:
        pad = ((0, m_pad - rows), (0, 0))
        xs2 = jnp.pad(xs2, pad)
        xg2 = jnp.pad(xg2, pad)

    (w0a, b0a, w0b, b0b, w1a, b1a, w1b, b1b, wl, bl) = params
    # Split the (512, 256) linear weight into seq / graph halves; bf16 operands.
    bf = jnp.bfloat16
    wls, wlg = wl[:HID].astype(bf), wl[HID:].astype(bf)
    w0a_, w0b_ = w0a.astype(bf), w0b.astype(bf)
    w1a_, w1b_ = w1a.astype(bf), w1b.astype(bf)
    b0a_, b0b_ = b0a.reshape(1, HID), b0b.reshape(1, HID)   # biases stay f32
    b1a_, b1b_ = b1a.reshape(1, HID), b1b.reshape(1, HID)
    bl_ = bl.reshape(1, HID)

    grid_m = m_pad // tile_m
    x_spec = pl.BlockSpec((tile_m, HID), lambda i: (i, 0))
    w_spec = pl.BlockSpec((HID, HID), lambda i: (0, 0))     # constant index_map:
    b_spec = pl.BlockSpec((1, HID), lambda i: (0, 0))       # DMA'd once, stays resident

    cost = pl.CostEstimate(
        flops=6 * 2 * m_pad * HID * HID,
        transcendentals=2 * m_pad,
        bytes_accessed=3 * m_pad * HID * 4 + 6 * HID * HID * 2 + 5 * HID * 4,
    )

    out = pl.pallas_call(
        cross_interaction_kernel,
        out_shape=jax.ShapeDtypeStruct((m_pad, HID), x_seq.dtype),
        grid_spec=pltpu.PrefetchScalarGridSpec(
            num_scalar_prefetch=0,
            grid=(grid_m,),
            in_specs=[
                x_spec, x_spec,                      # x_seq, x_graph row tiles
                w_spec, b_spec, w_spec, b_spec,      # crossInteraction0
                w_spec, b_spec, w_spec, b_spec,      # crossInteraction1
                w_spec, w_spec, b_spec,              # final linear (split) + bias
            ],
            out_specs=x_spec,
        ),
        compiler_params=pltpu.CompilerParams(
            dimension_semantics=("parallel",),       # shards row tiles across 2 TCs on v7x
        ),
        cost_estimate=cost,
    )(xs2, xg2, w0a_, b0a_, w0b_, b0b_, w1a_, b1a_, w1b_, b1b_, wls, wlg, bl_)

    return out[:rows].reshape(B, N, HID)


def reference_matched(x_seq, x_graph, params):
    """Spec math mirroring the kernel's precision (bf16 MXU operands, f32 acc,
    CI scaling applied after the final matmul)."""
    (w0a, b0a, w0b, b0b, w1a, b1a, w1b, b1b, wl, bl) = params
    bf = jnp.bfloat16

    def dot(a, b):
        return jnp.dot(a.astype(bf), b.astype(bf),
                       preferred_element_type=jnp.float32)

    mlp0 = dot(jnp.maximum(dot(x_graph, w0a) + b0a, 0.0), w0b) + b0b
    mlp1 = dot(jnp.maximum(dot(x_seq, w1a) + b1a, 0.0), w1b) + b1b
    ci0 = jnp.tanh(jnp.einsum("bij,bij->bi", mlp0, x_seq)) + 1.0
    ci1 = jnp.tanh(jnp.einsum("bij,bij->bi", mlp1, x_graph)) + 1.0
    out = (ci0[..., None] * dot(x_seq, wl[:HID])
           + ci1[..., None] * dot(x_graph, wl[HID:]) + bl)
    return out


def reference_f32(x_seq, x_graph, params):
    """Exact PyTorch-order spec math in f32."""
    (w0a, b0a, w0b, b0b, w1a, b1a, w1b, b1b, wl, bl) = params
    mlp0 = jnp.dot(jnp.maximum(jnp.dot(x_graph, w0a) + b0a, 0.0), w0b) + b0b
    mlp1 = jnp.dot(jnp.maximum(jnp.dot(x_seq, w1a) + b1a, 0.0), w1b) + b1b
    ci0 = jnp.tanh(jnp.einsum("bij,bij->bi", mlp0, x_seq)) + 1.0
    ci1 = jnp.tanh(jnp.einsum("bij,bij->bi", mlp1, x_graph)) + 1.0
    xs = jnp.einsum("bij,bi->bij", x_seq, ci0)
    xg = jnp.einsum("bij,bi->bij", x_graph, ci1)
    x = jnp.concatenate((xs, xg), axis=2)
    return jnp.dot(x, wl) + bl


def make_params(key):
    ks = jax.random.split(key, 10)
    scale = 0.05
    w0a = jax.random.normal(ks[0], (HID, HID), jnp.float32) * scale
    b0a = jax.random.normal(ks[1], (HID,), jnp.float32) * scale
    w0b = jax.random.normal(ks[2], (HID, HID), jnp.float32) * scale
    b0b = jax.random.normal(ks[3], (HID,), jnp.float32) * scale
    w1a = jax.random.normal(ks[4], (HID, HID), jnp.float32) * scale
    b1a = jax.random.normal(ks[5], (HID,), jnp.float32) * scale
    w1b = jax.random.normal(ks[6], (HID, HID), jnp.float32) * scale
    b1b = jax.random.normal(ks[7], (HID,), jnp.float32) * scale
    wl = jax.random.normal(ks[8], (2 * HID, HID), jnp.float32) * scale
    bl = jax.random.normal(ks[9], (HID,), jnp.float32) * scale
    return (w0a, b0a, w0b, b0b, w1a, b1a, w1b, b1b, wl, bl)


if __name__ == "__main__":
    key = jax.random.PRNGKey(0)
    k_seq, k_graph, k_params = jax.random.split(key, 3)

    B, N = 2, 8  # small batch/sequence; hidden fixed at 256 by the module
    x_seq = jax.random.normal(k_seq, (B, N, HID), jnp.float32)
    x_graph = jax.random.normal(k_graph, (B, N, HID), jnp.float32)
    params = make_params(k_params)

    out = jax.block_until_ready(cross_interaction(x_seq, x_graph, params))
    assert out.shape == (B, N, HID)

    # Tight check: kernel vs spec math at matched (bf16-operand, f32-acc) precision.
    ref_match = reference_matched(x_seq, x_graph, params)
    assert jnp.allclose(out, ref_match, atol=2e-3, rtol=2e-3)

    # Sanity check: bf16 MXU operands vs full-f32 PyTorch-order spec.
    ref_f32 = reference_f32(x_seq, x_graph, params)
    assert jnp.allclose(out, ref_f32, atol=1.5e-1, rtol=1e-1)

    print("KERNEL_OK")
</pallas_src>

<mosaic_0001>
module attributes {stable_mosaic.version = 11 : i64} {
  func.func @cross_interaction_kernel(%arg0: i32, %arg1: memref<16x256xf32, #tpu.memory_space<vmem>>, %arg2: memref<16x256xf32, #tpu.memory_space<vmem>>, %arg3: memref<256x256xbf16, #tpu.memory_space<vmem>>, %arg4: memref<1x256xf32, #tpu.memory_space<vmem>>, %arg5: memref<256x256xbf16, #tpu.memory_space<vmem>>, %arg6: memref<1x256xf32, #tpu.memory_space<vmem>>, %arg7: memref<256x256xbf16, #tpu.memory_space<vmem>>, %arg8: memref<1x256xf32, #tpu.memory_space<vmem>>, %arg9: memref<256x256xbf16, #tpu.memory_space<vmem>>, %arg10: memref<1x256xf32, #tpu.memory_space<vmem>>, %arg11: memref<256x256xbf16, #tpu.memory_space<vmem>>, %arg12: memref<256x256xbf16, #tpu.memory_space<vmem>>, %arg13: memref<1x256xf32, #tpu.memory_space<vmem>>, %arg14: memref<16x256xf32, #tpu.memory_space<vmem>>) attributes {dimension_semantics = [#tpu.dimension_semantics<parallel>], iteration_bounds = array<i64: 1>, scalar_prefetch = 0 : i64, scratch_operands = 0 : i64, tpu.core_type = #tpu.core_type<tc>, window_params = [{transform_indices = @transform_0, window_bounds = array<i64: 16, 256>}, {transform_indices = @transform_1, window_bounds = array<i64: 16, 256>}, {pipeline_mode = #tpu.pipeline_mode<synchronous>, transform_indices = @transform_2, window_bounds = array<i64: 256, 256>}, {pipeline_mode = #tpu.pipeline_mode<synchronous>, transform_indices = @transform_3, window_bounds = array<i64: 1, 256>}, {pipeline_mode = #tpu.pipeline_mode<synchronous>, transform_indices = @transform_4, window_bounds = array<i64: 256, 256>}, {pipeline_mode = #tpu.pipeline_mode<synchronous>, transform_indices = @transform_5, window_bounds = array<i64: 1, 256>}, {pipeline_mode = #tpu.pipeline_mode<synchronous>, transform_indices = @transform_6, window_bounds = array<i64: 256, 256>}, {pipeline_mode = #tpu.pipeline_mode<synchronous>, transform_indices = @transform_7, window_bounds = array<i64: 1, 256>}, {pipeline_mode = #tpu.pipeline_mode<synchronous>, transform_indices = @transform_8, window_bounds = array<i64: 256, 256>}, {pipeline_mode = #tpu.pipeline_mode<synchronous>, transform_indices = @transform_9, window_bounds = array<i64: 1, 256>}, {pipeline_mode = #tpu.pipeline_mode<synchronous>, transform_indices = @transform_10, window_bounds = array<i64: 256, 256>}, {pipeline_mode = #tpu.pipeline_mode<synchronous>, transform_indices = @transform_11, window_bounds = array<i64: 256, 256>}, {pipeline_mode = #tpu.pipeline_mode<synchronous>, transform_indices = @transform_12, window_bounds = array<i64: 1, 256>}, {transform_indices = @transform_13, window_bounds = array<i64: 16, 256>}]} {
    %c0 = arith.constant 0 : index
    %c0_0 = arith.constant 0 : index
    %0 = vector.load %arg1[%c0, %c0_0] : memref<16x256xf32, #tpu.memory_space<vmem>>, vector<16x256xf32>
    %c0_1 = arith.constant 0 : index
    %c0_2 = arith.constant 0 : index
    %1 = vector.load %arg2[%c0_1, %c0_2] : memref<16x256xf32, #tpu.memory_space<vmem>>, vector<16x256xf32>
    %2 = arith.truncf %0 : vector<16x256xf32> to vector<16x256xbf16>
    %3 = arith.truncf %1 : vector<16x256xf32> to vector<16x256xbf16>
    %c0_3 = arith.constant 0 : index
    %c0_4 = arith.constant 0 : index
    %4 = vector.load %arg3[%c0_3, %c0_4] : memref<256x256xbf16, #tpu.memory_space<vmem>>, vector<256x256xbf16>
    %cst = arith.constant dense<0.000000e+00> : vector<16x256xf32>
    %5 = tpu.matmul %3, %4, %cst {dimension_numbers = #tpu.dot_dimension_numbers<[1], [0], [0], [1], [0, 0, 1, 1], [], []>} : vector<16x256xbf16>, vector<256x256xbf16>, vector<16x256xf32> -> vector<16x256xf32>
    %c0_5 = arith.constant 0 : index
    %c0_6 = arith.constant 0 : index
    %6 = vector.load %arg4[%c0_5, %c0_6] : memref<1x256xf32, #tpu.memory_space<vmem>>, vector<1x256xf32>
    %7 = vector.broadcast %6 : vector<1x256xf32> to vector<16x256xf32>
    %8 = arith.addf %5, %7 : vector<16x256xf32>
    %cst_7 = arith.constant 0.000000e+00 : f32
    %9 = vector.broadcast %cst_7 : f32 to vector<16x256xf32>
    %10 = arith.maximumf %8, %9 : vector<16x256xf32>
    %11 = arith.truncf %10 : vector<16x256xf32> to vector<16x256xbf16>
    %c0_8 = arith.constant 0 : index
    %c0_9 = arith.constant 0 : index
    %12 = vector.load %arg5[%c0_8, %c0_9] : memref<256x256xbf16, #tpu.memory_space<vmem>>, vector<256x256xbf16>
    %cst_10 = arith.constant dense<0.000000e+00> : vector<16x256xf32>
    %13 = tpu.matmul %11, %12, %cst_10 {dimension_numbers = #tpu.dot_dimension_numbers<[1], [0], [0], [1], [0, 0, 1, 1], [], []>} : vector<16x256xbf16>, vector<256x256xbf16>, vector<16x256xf32> -> vector<16x256xf32>
    %c0_11 = arith.constant 0 : index
    %c0_12 = arith.constant 0 : index
    %14 = vector.load %arg6[%c0_11, %c0_12] : memref<1x256xf32, #tpu.memory_space<vmem>>, vector<1x256xf32>
    %15 = vector.broadcast %14 : vector<1x256xf32> to vector<16x256xf32>
    %16 = arith.addf %13, %15 : vector<16x256xf32>
    %17 = arith.mulf %16, %0 : vector<16x256xf32>
    %cst_13 = arith.constant dense<0.000000e+00> : vector<16xf32>
    %18 = vector.multi_reduction <add>, %17, %cst_13 [1] : vector<16x256xf32> to vector<16xf32>
    %19 = vector.shape_cast %18 : vector<16xf32> to vector<16x1xf32>
    %20 = math.tanh %19 : vector<16x1xf32>
    %cst_14 = arith.constant 1.000000e+00 : f32
    %21 = vector.broadcast %cst_14 : f32 to vector<16x1xf32>
    %22 = arith.addf %20, %21 : vector<16x1xf32>
    %c0_15 = arith.constant 0 : index
    %c0_16 = arith.constant 0 : index
    %23 = vector.load %arg7[%c0_15, %c0_16] : memref<256x256xbf16, #tpu.memory_space<vmem>>, vector<256x256xbf16>
    %cst_17 = arith.constant dense<0.000000e+00> : vector<16x256xf32>
    %24 = tpu.matmul %2, %23, %cst_17 {dimension_numbers = #tpu.dot_dimension_numbers<[1], [0], [0], [1], [0, 0, 1, 1], [], []>} : vector<16x256xbf16>, vector<256x256xbf16>, vector<16x256xf32> -> vector<16x256xf32>
    %c0_18 = arith.constant 0 : index
    %c0_19 = arith.constant 0 : index
    %25 = vector.load %arg8[%c0_18, %c0_19] : memref<1x256xf32, #tpu.memory_space<vmem>>, vector<1x256xf32>
    %26 = vector.broadcast %25 : vector<1x256xf32> to vector<16x256xf32>
    %27 = arith.addf %24, %26 : vector<16x256xf32>
    %cst_20 = arith.constant 0.000000e+00 : f32
    %28 = vector.broadcast %cst_20 : f32 to vector<16x256xf32>
    %29 = arith.maximumf %27, %28 : vector<16x256xf32>
    %30 = arith.truncf %29 : vector<16x256xf32> to vector<16x256xbf16>
    %c0_21 = arith.constant 0 : index
    %c0_22 = arith.constant 0 : index
    %31 = vector.load %arg9[%c0_21, %c0_22] : memref<256x256xbf16, #tpu.memory_space<vmem>>, vector<256x256xbf16>
    %cst_23 = arith.constant dense<0.000000e+00> : vector<16x256xf32>
    %32 = tpu.matmul %30, %31, %cst_23 {dimension_numbers = #tpu.dot_dimension_numbers<[1], [0], [0], [1], [0, 0, 1, 1], [], []>} : vector<16x256xbf16>, vector<256x256xbf16>, vector<16x256xf32> -> vector<16x256xf32>
    %c0_24 = arith.constant 0 : index
    %c0_25 = arith.constant 0 : index
    %33 = vector.load %arg10[%c0_24, %c0_25] : memref<1x256xf32, #tpu.memory_space<vmem>>, vector<1x256xf32>
    %34 = vector.broadcast %33 : vector<1x256xf32> to vector<16x256xf32>
    %35 = arith.addf %32, %34 : vector<16x256xf32>
    %36 = arith.mulf %35, %1 : vector<16x256xf32>
    %cst_26 = arith.constant dense<0.000000e+00> : vector<16xf32>
    %37 = vector.multi_reduction <add>, %36, %cst_26 [1] : vector<16x256xf32> to vector<16xf32>
    %38 = vector.shape_cast %37 : vector<16xf32> to vector<16x1xf32>
    %39 = math.tanh %38 : vector<16x1xf32>
    %cst_27 = arith.constant 1.000000e+00 : f32
    %40 = vector.broadcast %cst_27 : f32 to vector<16x1xf32>
    %41 = arith.addf %39, %40 : vector<16x1xf32>
    %c0_28 = arith.constant 0 : index
    %c0_29 = arith.constant 0 : index
    %42 = vector.load %arg11[%c0_28, %c0_29] : memref<256x256xbf16, #tpu.memory_space<vmem>>, vector<256x256xbf16>
    %cst_30 = arith.constant dense<0.000000e+00> : vector<16x256xf32>
    %43 = tpu.matmul %2, %42, %cst_30 {dimension_numbers = #tpu.dot_dimension_numbers<[1], [0], [0], [1], [0, 0, 1, 1], [], []>} : vector<16x256xbf16>, vector<256x256xbf16>, vector<16x256xf32> -> vector<16x256xf32>
    %44 = vector.broadcast %22 : vector<16x1xf32> to vector<16x256xf32>
    %45 = arith.mulf %44, %43 : vector<16x256xf32>
    %c0_31 = arith.constant 0 : index
    %c0_32 = arith.constant 0 : index
    %46 = vector.load %arg12[%c0_31, %c0_32] : memref<256x256xbf16, #tpu.memory_space<vmem>>, vector<256x256xbf16>
    %cst_33 = arith.constant dense<0.000000e+00> : vector<16x256xf32>
    %47 = tpu.matmul %3, %46, %cst_33 {dimension_numbers = #tpu.dot_dimension_numbers<[1], [0], [0], [1], [0, 0, 1, 1], [], []>} : vector<16x256xbf16>, vector<256x256xbf16>, vector<16x256xf32> -> vector<16x256xf32>
    %48 = vector.broadcast %41 : vector<16x1xf32> to vector<16x256xf32>
    %49 = arith.mulf %48, %47 : vector<16x256xf32>
    %50 = arith.addf %45, %49 : vector<16x256xf32>
    %c0_34 = arith.constant 0 : index
    %c0_35 = arith.constant 0 : index
    %51 = vector.load %arg13[%c0_34, %c0_35] : memref<1x256xf32, #tpu.memory_space<vmem>>, vector<1x256xf32>
    %52 = vector.broadcast %51 : vector<1x256xf32> to vector<16x256xf32>
    %53 = arith.addf %50, %52 : vector<16x256xf32>
    %c0_36 = arith.constant 0 : index
    %c0_37 = arith.constant 0 : index
    %54 = vector.load %arg14[%c0_36, %c0_37] : memref<16x256xf32, #tpu.memory_space<vmem>>, vector<16x256xf32>
    tpu.vector_store %arg14[%c0_36, %c0_37], %53 {strides = array<i32>} : memref<16x256xf32, #tpu.memory_space<vmem>>, vector<16x256xf32>,
    return
  }
  func.func @transform_0(%arg0: i32) -> (i32, i32) {
    %c0_i32 = arith.constant 0 : i32
    %c0_i32_0 = arith.constant 0 : i32
    return %arg0, %c0_i32 : i32, i32
  }
  func.func @transform_1(%arg0: i32) -> (i32, i32) {
    %c0_i32 = arith.constant 0 : i32
    %c0_i32_0 = arith.constant 0 : i32
    return %arg0, %c0_i32 : i32, i32
  }
  func.func @transform_2(%arg0: i32) -> (i32, i32) {
    %c0_i32 = arith.constant 0 : i32
    %c0_i32_0 = arith.constant 0 : i32
    %c0_i32_1 = arith.constant 0 : i32
    return %c0_i32, %c0_i32_0 : i32, i32
  }
  func.func @transform_3(%arg0: i32) -> (i32, i32) {
    %c0_i32 = arith.constant 0 : i32
    %c0_i32_0 = arith.constant 0 : i32
    %c0_i32_1 = arith.constant 0 : i32
    return %c0_i32, %c0_i32_0 : i32, i32
  }
  func.func @transform_4(%arg0: i32) -> (i32, i32) {
    %c0_i32 = arith.constant 0 : i32
    %c0_i32_0 = arith.constant 0 : i32
    %c0_i32_1 = arith.constant 0 : i32
    return %c0_i32, %c0_i32_0 : i32, i32
  }
  func.func @transform_5(%arg0: i32) -> (i32, i32) {
    %c0_i32 = arith.constant 0 : i32
    %c0_i32_0 = arith.constant 0 : i32
    %c0_i32_1 = arith.constant 0 : i32
    return %c0_i32, %c0_i32_0 : i32, i32
  }
  func.func @transform_6(%arg0: i32) -> (i32, i32) {
    %c0_i32 = arith.constant 0 : i32
    %c0_i32_0 = arith.constant 0 : i32
    %c0_i32_1 = arith.constant 0 : i32
    return %c0_i32, %c0_i32_0 : i32, i32
  }
  func.func @transform_7(%arg0: i32) -> (i32, i32) {
    %c0_i32 = arith.constant 0 : i32
    %c0_i32_0 = arith.constant 0 : i32
    %c0_i32_1 = arith.constant 0 : i32
    return %c0_i32, %c0_i32_0 : i32, i32
  }
  func.func @transform_8(%arg0: i32) -> (i32, i32) {
    %c0_i32 = arith.constant 0 : i32
    %c0_i32_0 = arith.constant 0 : i32
    %c0_i32_1 = arith.constant 0 : i32
    return %c0_i32, %c0_i32_0 : i32, i32
  }
  func.func @transform_9(%arg0: i32) -> (i32, i32) {
    %c0_i32 = arith.constant 0 : i32
    %c0_i32_0 = arith.constant 0 : i32
    %c0_i32_1 = arith.constant 0 : i32
    return %c0_i32, %c0_i32_0 : i32, i32
  }
  func.func @transform_10(%arg0: i32) -> (i32, i32) {
    %c0_i32 = arith.constant 0 : i32
    %c0_i32_0 = arith.constant 0 : i32
    %c0_i32_1 = arith.constant 0 : i32
    return %c0_i32, %c0_i32_0 : i32, i32
  }
  func.func @transform_11(%arg0: i32) -> (i32, i32) {
    %c0_i32 = arith.constant 0 : i32
    %c0_i32_0 = arith.constant 0 : i32
    %c0_i32_1 = arith.constant 0 : i32
    return %c0_i32, %c0_i32_0 : i32, i32
  }
  func.func @transform_12(%arg0: i32) -> (i32, i32) {
    %c0_i32 = arith.constant 0 : i32
    %c0_i32_0 = arith.constant 0 : i32
    %c0_i32_1 = arith.constant 0 : i32
    return %c0_i32, %c0_i32_0 : i32, i32
  }
  func.func @transform_13(%arg0: i32) -> (i32, i32) {
    %c0_i32 = arith.constant 0 : i32
    %c0_i32_0 = arith.constant 0 : i32
    return %arg0, %c0_i32 : i32, i32
  }
}

</mosaic_0001>

<llo_original>
// kernel: cross_interaction.1
$region0: #{cross_interaction.1}
  #allocation0 [shape = 'u32[]', space=smem, size = 0x4, offset = 0x4, fixed_abs, tag = 'smem constant byte address 0x4 - core index']
  #allocation1 [shape = 'u32[144,128]{1,0:T(1,128)}', space=vmem, size = 0x12000, scoped, tag = 'internal scratch']
  %s0 = inlined_call_operand.vmem [shape: f32[16,256], index: 0, kind: input, shape index: {}]
  %s1 = inlined_call_operand.vmem [shape: f32[16,256], index: 1, kind: input, shape index: {}]
  %s2 = inlined_call_operand.vmem [shape: bf16[256,256], index: 2, kind: input, shape index: {}]
  %s3 = inlined_call_operand.vmem [shape: f32[1,256], index: 3, kind: input, shape index: {}]
  %s4 = inlined_call_operand.vmem [shape: bf16[256,256], index: 4, kind: input, shape index: {}]
  %s5 = inlined_call_operand.vmem [shape: f32[1,256], index: 5, kind: input, shape index: {}]
  %s6 = inlined_call_operand.vmem [shape: bf16[256,256], index: 6, kind: input, shape index: {}]
  %s7 = inlined_call_operand.vmem [shape: f32[1,256], index: 7, kind: input, shape index: {}]
  %s8 = inlined_call_operand.vmem [shape: bf16[256,256], index: 8, kind: input, shape index: {}]
  %s9 = inlined_call_operand.vmem [shape: f32[1,256], index: 9, kind: input, shape index: {}]
  %s10 = inlined_call_operand.vmem [shape: bf16[256,256], index: 10, kind: input, shape index: {}]
  %s11 = inlined_call_operand.vmem [shape: bf16[256,256], index: 11, kind: input, shape index: {}]
  %s12 = inlined_call_operand.vmem [shape: f32[1,256], index: 12, kind: input, shape index: {}]
  %s13 = inlined_call_operand.hbm [shape: f32[16,256], index: 13, kind: output, shape index: {}]
  %s14 = sld [smem:[#allocation0]]
  $region62: #{cross_interaction.1} parent=0
    _
  %s16 = ssub.s32 1, %s14
  %s17 = scalar_select 0, %s16, %s14
  $region1: #{cross_interaction.1} parent=0
    #allocation2 [shape = 'u8[16384]{0}', space=vmem, size = 0x4000, scoped, tag = 'output window, operand 0, single buffered']
    #allocation3 [shape = 's32[1]{0}', space=sflag, size = 0x4, scoped, tag = 'scoped memory for cross_interaction.1']
    %18 = vsyncpa [#allocation3], 0
    // Predicated region
    $region2: #{cross_interaction.1} parent=1 // pred_check
      _
    $region3: #{cross_interaction.1} parent=1 // pred_check_branch
      %20 = sbr.rel (0) target = $region5
    $region4: #{cross_interaction.1} parent=1 // pred_region
      _
    $region5: #{cross_interaction.1} parent=1 // pred_fallthru
      _
    // Predicated region
    $region6: #{cross_interaction.1} parent=1 // pred_check
      _
    $region7: #{cross_interaction.1} parent=1 // pred_check_branch
      %22 = sbr.rel (0) target = $region9
    $region8: #{cross_interaction.1} parent=1 // pred_region
      _
    $region9: #{cross_interaction.1} parent=1 // pred_fallthru
      _
    // Predicated region
    $region10: #{cross_interaction.1} parent=1 // pred_check
      _
    $region11: #{cross_interaction.1} parent=1 // pred_check_branch
      %24 = sbr.rel (0) target = $region13
    $region12: #{cross_interaction.1} parent=1 // pred_region
      _
    $region13: #{cross_interaction.1} parent=1 // pred_fallthru
      _
    // Predicated region
    $region14: #{cross_interaction.1} parent=1 // pred_check
      _
    $region15: #{cross_interaction.1} parent=1 // pred_check_branch
      %26 = sbr.rel (0) target = $region17
    $region16: #{cross_interaction.1} parent=1 // pred_region
      _
    $region17: #{cross_interaction.1} parent=1 // pred_fallthru
      _
    // Predicated region
    $region18: #{cross_interaction.1} parent=1 // pred_check
      _
    $region19: #{cross_interaction.1} parent=1 // pred_check_branch
      %28 = sbr.rel (0) target = $region21
    $region20: #{cross_interaction.1} parent=1 // pred_region
      _
    $region21: #{cross_interaction.1} parent=1 // pred_fallthru
      _
    // Predicated region
    $region22: #{cross_interaction.1} parent=1 // pred_check
      _
    $region23: #{cross_interaction.1} parent=1 // pred_check_branch
      %30 = sbr.rel (0) target = $region25
    $region24: #{cross_interaction.1} parent=1 // pred_region
      _
    $region25: #{cross_interaction.1} parent=1 // pred_fallthru
      _
    // Predicated region
    $region26: #{cross_interaction.1} parent=1 // pred_check
      _
    $region27: #{cross_interaction.1} parent=1 // pred_check_branch
      %32 = sbr.rel (0) target = $region29
    $region28: #{cross_interaction.1} parent=1 // pred_region
      _
    $region29: #{cross_interaction.1} parent=1 // pred_fallthru
      _
    // Predicated region
    $region30: #{cross_interaction.1} parent=1 // pred_check
      _
    $region31: #{cross_interaction.1} parent=1 // pred_check_branch
      %34 = sbr.rel (0) target = $region33
    $region32: #{cross_interaction.1} parent=1 // pred_region
      _
    $region33: #{cross_interaction.1} parent=1 // pred_fallthru
      _
    // Predicated region
    $region34: #{cross_interaction.1} parent=1 // pred_check
      _
    $region35: #{cross_interaction.1} parent=1 // pred_check_branch
      %36 = sbr.rel (0) target = $region37
    $region36: #{cross_interaction.1} parent=1 // pred_region
      _
    $region37: #{cross_interaction.1} parent=1 // pred_fallthru
      _
    // Predicated region
    $region38: #{cross_interaction.1} parent=1 // pred_check
      _
    $region39: #{cross_interaction.1} parent=1 // pred_check_branch
      %38 = sbr.rel (0) target = $region41
    $region40: #{cross_interaction.1} parent=1 // pred_region
      _
    $region41: #{cross_interaction.1} parent=1 // pred_fallthru
      _
    // Predicated region
    $region42: #{cross_interaction.1} parent=1 // pred_check
      _
    $region43: #{cross_interaction.1} parent=1 // pred_check_branch
      %40 = sbr.rel (0) target = $region45
    $region44: #{cross_interaction.1} parent=1 // pred_region
      _
    $region45: #{cross_interaction.1} parent=1 // pred_fallthru
      _
    // Predicated region
    $region46: #{cross_interaction.1} parent=1 // pred_check
      _
    $region47: #{cross_interaction.1} parent=1 // pred_check_branch
      %42 = sbr.rel (0) target = $region49
    $region48: #{cross_interaction.1} parent=1 // pred_region
      _
    $region49: #{cross_interaction.1} parent=1 // pred_fallthru
      _
    // Predicated region
    $region50: #{cross_interaction.1} parent=1 // pred_check
      _
    $region51: #{cross_interaction.1} parent=1 // pred_check_branch
      %44 = sbr.rel (0) target = $region53
    $region52: #{cross_interaction.1} parent=1 // pred_region
      _
    $region53: #{cross_interaction.1} parent=1 // pred_fallthru
      _
    %v45 = vld [vmem:[%s0] sm:$0xff]
    %v46 = vld [vmem:[%s0 + $0x8] sm:$0xff]
    %v47 = vld [vmem:[%s0 + $0x10] sm:$0xff]
    %v48 = vld [vmem:[%s0 + $0x18] sm:$0xff]
    %v49 = vld [vmem:[%s1] sm:$0xff]
    %v50 = vld [vmem:[%s1 + $0x8] sm:$0xff]
    %v51 = vld [vmem:[%s1 + $0x10] sm:$0xff]
    %v52 = vld [vmem:[%s1 + $0x18] sm:$0xff]
    %v53 = vpack.c.bf16 %v47, %v45
    %v54 = vpack.c.bf16 %v48, %v46
    %v55 = vpack.c.bf16 %v51, %v49
    %v56 = vpack.c.bf16 %v52, %v50
    %v57 = vld [vmem:[%s2] sm:$0xff]
    %v58 = vld [vmem:[%s2 + $0x8] sm:$0xff]
    %v59 = vld [vmem:[%s2 + $0x10] sm:$0xff]
    %v60 = vld [vmem:[%s2 + $0x18] sm:$0xff]
    %v61 = vld [vmem:[%s2 + $0x20] sm:$0xff]
    %v62 = vld [vmem:[%s2 + $0x28] sm:$0xff]
    %v63 = vld [vmem:[%s2 + $0x30] sm:$0xff]
    %v64 = vld [vmem:[%s2 + $0x38] sm:$0xff]
    %v65 = vld [vmem:[%s2 + $0x40] sm:$0xff]
    %v66 = vld [vmem:[%s2 + $0x48] sm:$0xff]
    %v67 = vld [vmem:[%s2 + $0x50] sm:$0xff]
    %v68 = vld [vmem:[%s2 + $0x58] sm:$0xff]
    %v69 = vld [vmem:[%s2 + $0x60] sm:$0xff]
    %v70 = vld [vmem:[%s2 + $0x68] sm:$0xff]
    %v71 = vld [vmem:[%s2 + $0x70] sm:$0xff]
    %v72 = vld [vmem:[%s2 + $0x78] sm:$0xff]
    %v73 = vld [vmem:[%s2 + $0x80] sm:$0xff]
    %v74 = vld [vmem:[%s2 + $0x88] sm:$0xff]
    %v75 = vld [vmem:[%s2 + $0x90] sm:$0xff]
    %v76 = vld [vmem:[%s2 + $0x98] sm:$0xff]
    %v77 = vld [vmem:[%s2 + $0xa0] sm:$0xff]
    %v78 = vld [vmem:[%s2 + $0xa8] sm:$0xff]
    %v79 = vld [vmem:[%s2 + $0xb0] sm:$0xff]
    %v80 = vld [vmem:[%s2 + $0xb8] sm:$0xff]
    %v81 = vld [vmem:[%s2 + $0xc0] sm:$0xff]
    %v82 = vld [vmem:[%s2 + $0xc8] sm:$0xff]
    %v83 = vld [vmem:[%s2 + $0xd0] sm:$0xff]
    %v84 = vld [vmem:[%s2 + $0xd8] sm:$0xff]
    %v85 = vld [vmem:[%s2 + $0xe0] sm:$0xff]
    %v86 = vld [vmem:[%s2 + $0xe8] sm:$0xff]
    %v87 = vld [vmem:[%s2 + $0xf0] sm:$0xff]
    %v88 = vld [vmem:[%s2 + $0xf8] sm:$0xff]
    %v89 = vld [vmem:[%s3] sm:$0x3]
    %v91 = vlaneseq
    %v92 = vshrl.u32 %v91, 7
    %v93 = vsub.s32 0, %v92
    %v94 = vrot.slane %v89, %v93
    %v95 = vlaneseq
    %v96 = vshrl.u32 %v95, 7
    %v97 = vsub.s32 1, %v96
    %v98 = vrot.slane %v89, %v97
    %v133 = vunpack.c.l.b16 %v57
    %v134 = vunpack.c.h.b16 %v57
    %v135 = vunpack.c.l.b16 %v58
    %v136 = vunpack.c.h.b16 %v58
    %v137 = vunpack.c.l.b16 %v59
    %v138 = vunpack.c.h.b16 %v59
    %v139 = vunpack.c.l.b16 %v60
    %v140 = vunpack.c.h.b16 %v60
    %v141 = vunpack.c.l.b16 %v61
    %v142 = vunpack.c.h.b16 %v61
    %v143 = vunpack.c.l.b16 %v62
    %v144 = vunpack.c.h.b16 %v62
    %v145 = vunpack.c.l.b16 %v63
    %v146 = vunpack.c.h.b16 %v63
    %v147 = vunpack.c.l.b16 %v64
    %v148 = vunpack.c.h.b16 %v64
    %v149 = vunpack.c.l.b16 %v65
    %v150 = vunpack.c.h.b16 %v65
    %v151 = vunpack.c.l.b16 %v66
    %v152 = vunpack.c.h.b16 %v66
    %v153 = vunpack.c.l.b16 %v67
    %v154 = vunpack.c.h.b16 %v67
    %v155 = vunpack.c.l.b16 %v68
    %v156 = vunpack.c.h.b16 %v68
    %v157 = vunpack.c.l.b16 %v69
    %v158 = vunpack.c.h.b16 %v69
    %v159 = vunpack.c.l.b16 %v70
    %v160 = vunpack.c.h.b16 %v70
    %v161 = vunpack.c.l.b16 %v71
    %v162 = vunpack.c.h.b16 %v71
    %v163 = vunpack.c.l.b16 %v72
    %v164 = vunpack.c.h.b16 %v72
    %v165 = vunpack.c.l.b16 %v73
    %v166 = vunpack.c.h.b16 %v73
    %v167 = vunpack.c.l.b16 %v74
    %v168 = vunpack.c.h.b16 %v74
    %v169 = vunpack.c.l.b16 %v75
    %v170 = vunpack.c.h.b16 %v75
    %v171 = vunpack.c.l.b16 %v76
    %v172 = vunpack.c.h.b16 %v76
    %v173 = vunpack.c.l.b16 %v77
    %v174 = vunpack.c.h.b16 %v77
    %v175 = vunpack.c.l.b16 %v78
    %v176 = vunpack.c.h.b16 %v78
    %v177 = vunpack.c.l.b16 %v79
    %v178 = vunpack.c.h.b16 %v79
    %v179 = vunpack.c.l.b16 %v80
    %v180 = vunpack.c.h.b16 %v80
    %v181 = vunpack.c.l.b16 %v81
    %v182 = vunpack.c.h.b16 %v81
    %v183 = vunpack.c.l.b16 %v82
    %v184 = vunpack.c.h.b16 %v82
    %v185 = vunpack.c.l.b16 %v83
    %v186 = vunpack.c.h.b16 %v83
    %v187 = vunpack.c.l.b16 %v84
    %v188 = vunpack.c.h.b16 %v84
    %v189 = vunpack.c.l.b16 %v85
    %v190 = vunpack.c.h.b16 %v85
    %v191 = vunpack.c.l.b16 %v86
    %v192 = vunpack.c.h.b16 %v86
    %v193 = vunpack.c.l.b16 %v87
    %v194 = vunpack.c.h.b16 %v87
    %v195 = vunpack.c.l.b16 %v88
    %v196 = vunpack.c.h.b16 %v88
    %v197 = vpack.c.b16 %v135, %v133
    %v198 = vpack.c.b16 %v136, %v134
    %v199 = vpack.c.b16 %v139, %v137
    %v200 = vpack.c.b16 %v140, %v138
    %v201 = vpack.c.b16 %v143, %v141
    %v202 = vpack.c.b16 %v144, %v142
    %v203 = vpack.c.b16 %v147, %v145
    %v204 = vpack.c.b16 %v148, %v146
    %v205 = vpack.c.b16 %v151, %v149
    %v206 = vpack.c.b16 %v152, %v150
    %v207 = vpack.c.b16 %v155, %v153
    %v208 = vpack.c.b16 %v156, %v154
    %v209 = vpack.c.b16 %v159, %v157
    %v210 = vpack.c.b16 %v160, %v158
    %v211 = vpack.c.b16 %v163, %v161
    %v212 = vpack.c.b16 %v164, %v162
    %v213 = vpack.c.b16 %v167, %v165
    %v214 = vpack.c.b16 %v168, %v166
    %v215 = vpack.c.b16 %v171, %v169
    %v216 = vpack.c.b16 %v172, %v170
    %v217 = vpack.c.b16 %v175, %v173
    %v218 = vpack.c.b16 %v176, %v174
    %v219 = vpack.c.b16 %v179, %v177
    %v220 = vpack.c.b16 %v180, %v178
    %v221 = vpack.c.b16 %v183, %v181
    %v222 = vpack.c.b16 %v184, %v182
    %v223 = vpack.c.b16 %v187, %v185
    %v224 = vpack.c.b16 %v188, %v186
    %v225 = vpack.c.b16 %v191, %v189
    %v226 = vpack.c.b16 %v192, %v190
    %v227 = vpack.c.b16 %v195, %v193
    %v228 = vpack.c.b16 %v196, %v194
    %261 = vmatprep.subr.bf16.mxu0 %v212
    %262 = vmatpush1.bf16.msra.mxu0 %v211
    %263 = vmatprep.subr.bf16.mxu0 %v210
    %264 = vmatpush1.bf16.msra.mxu0 %v209
    %265 = vmatprep.subr.bf16.mxu0 %v208
    %266 = vmatpush1.bf16.msra.mxu0 %v207
    %267 = vmatprep.subr.bf16.mxu0 %v206
    %268 = vmatpush1.bf16.msra.mxu0 %v205
    %269 = vmatprep.subr.bf16.mxu0 %v204
    %270 = vmatpush1.bf16.msra.mxu0 %v203
    %271 = vmatprep.subr.bf16.mxu0 %v202
    %272 = vmatpush1.bf16.msra.mxu0 %v201
    %273 = vmatprep.subr.bf16.mxu0 %v200
    %274 = vmatpush1.bf16.msra.mxu0 %v199
    %275 = vmatprep.subr.bf16.mxu0 %v198
    %276 = vmatpush1.bf16.msra.mxu0 %v197
    %277 = vmatprep.subr.bf16.mxu0 %v228
    %278 = vmatpush2.bf16.msra.mxu0 %v227
    %279 = vmatprep.subr.bf16.mxu0 %v226
    %280 = vmatpush2.bf16.msra.mxu0 %v225
    %281 = vmatprep.subr.bf16.mxu0 %v224
    %282 = vmatpush2.bf16.msra.mxu0 %v223
    %283 = vmatprep.subr.bf16.mxu0 %v222
    %284 = vmatpush2.bf16.msra.mxu0 %v221
    %285 = vmatprep.subr.bf16.mxu0 %v220
    %286 = vmatpush2.bf16.msra.mxu0 %v219
    %287 = vmatprep.subr.bf16.mxu0 %v218
    %288 = vmatpush2.bf16.msra.mxu0 %v217
    %289 = vmatprep.subr.bf16.mxu0 %v216
    %290 = vmatpush2.bf16.msra.mxu0 %v215
    %291 = vmatprep.subr.bf16.mxu0 %v214
    %292 = vmatpush2.bf16.msra.mxu0 %v213
    %293 = vmatprep.mubr.bf16.mxu0 %v56
    %294 = vmatmul.mubr.bf16.gmra.mxu0 %v55
    %v295 = vpop.f32.mrf.mxu0
    %v296 = vadd.f32 %v94, %v295
    %v297 = vpop.f32.mrf.mxu0
    %v298 = vadd.f32 %v98, %v297
    %v299 = vpop.f32.mrf.mxu0
    %v300 = vadd.f32 %v94, %v299
    %v301 = vpop.f32.mrf.mxu0
    %v302 = vadd.f32 %v98, %v301
    %303 = vdwg.mxu0
    %v304 = vmax.f32 %v296, 0.0
    %v305 = vmax.f32 %v298, 0.0
    %v306 = vmax.f32 %v300, 0.0
    %v307 = vmax.f32 %v302, 0.0
    %v308 = vpack.c.bf16 %v306, %v304
    %v309 = vpack.c.bf16 %v307, %v305
    %v310 = vld [vmem:[%s4] sm:$0xff]
    %v311 = vld [vmem:[%s4 + $0x8] sm:$0xff]
    %v312 = vld [vmem:[%s4 + $0x10] sm:$0xff]
    %v313 = vld [vmem:[%s4 + $0x18] sm:$0xff]
    %v314 = vld [vmem:[%s4 + $0x20] sm:$0xff]
    %v315 = vld [vmem:[%s4 + $0x28] sm:$0xff]
    %v316 = vld [vmem:[%s4 + $0x30] sm:$0xff]
    %v317 = vld [vmem:[%s4 + $0x38] sm:$0xff]
    %v318 = vld [vmem:[%s4 + $0x40] sm:$0xff]
    %v319 = vld [vmem:[%s4 + $0x48] sm:$0xff]
    %v320 = vld [vmem:[%s4 + $0x50] sm:$0xff]
    %v321 = vld [vmem:[%s4 + $0x58] sm:$0xff]
    %v322 = vld [vmem:[%s4 + $0x60] sm:$0xff]
    %v323 = vld [vmem:[%s4 + $0x68] sm:$0xff]
    %v324 = vld [vmem:[%s4 + $0x70] sm:$0xff]
    %v325 = vld [vmem:[%s4 + $0x78] sm:$0xff]
    %v326 = vld [vmem:[%s4 + $0x80] sm:$0xff]
    %v327 = vld [vmem:[%s4 + $0x88] sm:$0xff]
    %v328 = vld [vmem:[%s4 + $0x90] sm:$0xff]
    %v329 = vld [vmem:[%s4 + $0x98] sm:$0xff]
    %v330 = vld [vmem:[%s4 + $0xa0] sm:$0xff]
    %v331 = vld [vmem:[%s4 + $0xa8] sm:$0xff]
    %v332 = vld [vmem:[%s4 + $0xb0] sm:$0xff]
    %v333 = vld [vmem:[%s4 + $0xb8] sm:$0xff]
    %v334 = vld [vmem:[%s4 + $0xc0] sm:$0xff]
    %v335 = vld [vmem:[%s4 + $0xc8] sm:$0xff]
    %v336 = vld [vmem:[%s4 + $0xd0] sm:$0xff]
    %v337 = vld [vmem:[%s4 + $0xd8] sm:$0xff]
    %v338 = vld [vmem:[%s4 + $0xe0] sm:$0xff]
    %v339 = vld [vmem:[%s4 + $0xe8] sm:$0xff]
    %v340 = vld [vmem:[%s4 + $0xf0] sm:$0xff]
    %v341 = vld [vmem:[%s4 + $0xf8] sm:$0xff]
    %v342 = vld [vmem:[%s5] sm:$0x3]
    %v344 = vlaneseq
    %v345 = vshrl.u32 %v344, 7
    %v346 = vsub.s32 0, %v345
    %v347 = vrot.slane %v342, %v346
    %v348 = vlaneseq
    %v349 = vshrl.u32 %v348, 7
    %v350 = vsub.s32 1, %v349
    %v351 = vrot.slane %v342, %v350
    %v386 = vunpack.c.l.b16 %v310
    %v387 = vunpack.c.h.b16 %v310
    %v388 = vunpack.c.l.b16 %v311
    %v389 = vunpack.c.h.b16 %v311
    %v390 = vunpack.c.l.b16 %v312
    %v391 = vunpack.c.h.b16 %v312
    %v392 = vunpack.c.l.b16 %v313
    %v393 = vunpack.c.h.b16 %v313
    %v394 = vunpack.c.l.b16 %v314
    %v395 = vunpack.c.h.b16 %v314
    %v396 = vunpack.c.l.b16 %v315
    %v397 = vunpack.c.h.b16 %v315
    %v398 = vunpack.c.l.b16 %v316
    %v399 = vunpack.c.h.b16 %v316
    %v400 = vunpack.c.l.b16 %v317
    %v401 = vunpack.c.h.b16 %v317
    %v402 = vunpack.c.l.b16 %v318
    %v403 = vunpack.c.h.b16 %v318
    %v404 = vunpack.c.l.b16 %v319
    %v405 = vunpack.c.h.b16 %v319
    %v406 = vunpack.c.l.b16 %v320
    %v407 = vunpack.c.h.b16 %v320
    %v408 = vunpack.c.l.b16 %v321
    %v409 = vunpack.c.h.b16 %v321
    %v410 = vunpack.c.l.b16 %v322
    %v411 = vunpack.c.h.b16 %v322
    %v412 = vunpack.c.l.b16 %v323
    %v413 = vunpack.c.h.b16 %v323
    %v414 = vunpack.c.l.b16 %v324
    %v415 = vunpack.c.h.b16 %v324
    %v416 = vunpack.c.l.b16 %v325
    %v417 = vunpack.c.h.b16 %v325
    %v418 = vunpack.c.l.b16 %v326
    %v419 = vunpack.c.h.b16 %v326
    %v420 = vunpack.c.l.b16 %v327
    %v421 = vunpack.c.h.b16 %v327
    %v422 = vunpack.c.l.b16 %v328
    %v423 = vunpack.c.h.b16 %v328
    %v424 = vunpack.c.l.b16 %v329
    %v425 = vunpack.c.h.b16 %v329
    %v426 = vunpack.c.l.b16 %v330
    %v427 = vunpack.c.h.b16 %v330
    %v428 = vunpack.c.l.b16 %v331
    %v429 = vunpack.c.h.b16 %v331
    %v430 = vunpack.c.l.b16 %v332
    %v431 = vunpack.c.h.b16 %v332
    %v432 = vunpack.c.l.b16 %v333
    %v433 = vunpack.c.h.b16 %v333
    %v434 = vunpack.c.l.b16 %v334
    %v435 = vunpack.c.h.b16 %v334
    %v436 = vunpack.c.l.b16 %v335
    %v437 = vunpack.c.h.b16 %v335
    %v438 = vunpack.c.l.b16 %v336
    %v439 = vunpack.c.h.b16 %v336
    %v440 = vunpack.c.l.b16 %v337
    %v441 = vunpack.c.h.b16 %v337
    %v442 = vunpack.c.l.b16 %v338
    %v443 = vunpack.c.h.b16 %v338
    %v444 = vunpack.c.l.b16 %v339
    %v445 = vunpack.c.h.b16 %v339
    %v446 = vunpack.c.l.b16 %v340
    %v447 = vunpack.c.h.b16 %v340
    %v448 = vunpack.c.l.b16 %v341
    %v449 = vunpack.c.h.b16 %v341
    %v450 = vpack.c.b16 %v388, %v386
    %v451 = vpack.c.b16 %v389, %v387
    %v452 = vpack.c.b16 %v392, %v390
    %v453 = vpack.c.b16 %v393, %v391
    %v454 = vpack.c.b16 %v396, %v394
    %v455 = vpack.c.b16 %v397, %v395
    %v456 = vpack.c.b16 %v400, %v398
    %v457 = vpack.c.b16 %v401, %v399
    %v458 = vpack.c.b16 %v404, %v402
    %v459 = vpack.c.b16 %v405, %v403
    %v460 = vpack.c.b16 %v408, %v406
    %v461 = vpack.c.b16 %v409, %v407
    %v462 = vpack.c.b16 %v412, %v410
    %v463 = vpack.c.b16 %v413, %v411
    %v464 = vpack.c.b16 %v416, %v414
    %v465 = vpack.c.b16 %v417, %v415
    %v466 = vpack.c.b16 %v420, %v418
    %v467 = vpack.c.b16 %v421, %v419
    %v468 = vpack.c.b16 %v424, %v422
    %v469 = vpack.c.b16 %v425, %v423
    %v470 = vpack.c.b16 %v428, %v426
    %v471 = vpack.c.b16 %v429, %v427
    %v472 = vpack.c.b16 %v432, %v430
    %v473 = vpack.c.b16 %v433, %v431
    %v474 = vpack.c.b16 %v436, %v434
    %v475 = vpack.c.b16 %v437, %v435
    %v476 = vpack.c.b16 %v440, %v438
    %v477 = vpack.c.b16 %v441, %v439
    %v478 = vpack.c.b16 %v444, %v442
    %v479 = vpack.c.b16 %v445, %v443
    %v480 = vpack.c.b16 %v448, %v446
    %v481 = vpack.c.b16 %v449, %v447
    %514 = vmatprep.subr.bf16.mxu0 %v465
    %515 = vmatpush1.bf16.msra.mxu0 %v464
    %516 = vmatprep.subr.bf16.mxu0 %v463
    %517 = vmatpush1.bf16.msra.mxu0 %v462
    %518 = vmatprep.subr.bf16.mxu0 %v461
    %519 = vmatpush1.bf16.msra.mxu0 %v460
    %520 = vmatprep.subr.bf16.mxu0 %v459
    %521 = vmatpush1.bf16.msra.mxu0 %v458
    %522 = vmatprep.subr.bf16.mxu0 %v457
    %523 = vmatpush1.bf16.msra.mxu0 %v456
    %524 = vmatprep.subr.bf16.mxu0 %v455
    %525 = vmatpush1.bf16.msra.mxu0 %v454
    %526 = vmatprep.subr.bf16.mxu0 %v453
    %527 = vmatpush1.bf16.msra.mxu0 %v452
    %528 = vmatprep.subr.bf16.mxu0 %v451
    %529 = vmatpush1.bf16.msra.mxu0 %v450
    %530 = vmatprep.subr.bf16.mxu0 %v481
    %531 = vmatpush2.bf16.msra.mxu0 %v480
    %532 = vmatprep.subr.bf16.mxu0 %v479
    %533 = vmatpush2.bf16.msra.mxu0 %v478
    %534 = vmatprep.subr.bf16.mxu0 %v477
    %535 = vmatpush2.bf16.msra.mxu0 %v476
    %536 = vmatprep.subr.bf16.mxu0 %v475
    %537 = vmatpush2.bf16.msra.mxu0 %v474
    %538 = vmatprep.subr.bf16.mxu0 %v473
    %539 = vmatpush2.bf16.msra.mxu0 %v472
    %540 = vmatprep.subr.bf16.mxu0 %v471
    %541 = vmatpush2.bf16.msra.mxu0 %v470
    %542 = vmatprep.subr.bf16.mxu0 %v469
    %543 = vmatpush2.bf16.msra.mxu0 %v468
    %544 = vmatprep.subr.bf16.mxu0 %v467
    %545 = vmatpush2.bf16.msra.mxu0 %v466
    %546 = vmatprep.mubr.bf16.mxu0 %v309
    %547 = vmatmul.mubr.bf16.gmra.mxu0 %v308
    %v548 = vpop.f32.mrf.mxu0
    %v549 = vadd.f32 %v347, %v548
    %v550 = vpop.f32.mrf.mxu0
    %v551 = vadd.f32 %v351, %v550
    %v552 = vpop.f32.mrf.mxu0
    %v553 = vadd.f32 %v347, %v552
    %v554 = vpop.f32.mrf.mxu0
    %v555 = vadd.f32 %v351, %v554
    %556 = vdwg.mxu0
    %v557 = vmul.f32 %v549, %v45
    %v558 = vmul.f32 %v551, %v46
    %v559 = vmul.f32 %v553, %v47
    %v560 = vmul.f32 %v555, %v48
    %v561 = vadd.f32 %v557, %v558
    %562 = vadd.xlane.f32.xlu0 %v561
    %v563 = vpop.xlane.xlu0 %562
    %v564 = vadd.f32 %v559, %v560
    %565 = vadd.xlane.f32.xlu0 %v564
    %v566 = vpop.xlane.xlu0 %565
    %v567 = vtanh.pop %v563
    %v568 = vtanh.pop %v566
    %v569 = vadd.f32 %v567, 1.0
    %v570 = vadd.f32 %v568, 1.0
    %v571 = vld [vmem:[%s6] sm:$0xff]
    %v572 = vld [vmem:[%s6 + $0x8] sm:$0xff]
    %v573 = vld [vmem:[%s6 + $0x10] sm:$0xff]
    %v574 = vld [vmem:[%s6 + $0x18] sm:$0xff]
    %v575 = vld [vmem:[%s6 + $0x20] sm:$0xff]
    %v576 = vld [vmem:[%s6 + $0x28] sm:$0xff]
    %v577 = vld [vmem:[%s6 + $0x30] sm:$0xff]
    %v578 = vld [vmem:[%s6 + $0x38] sm:$0xff]
    %v579 = vld [vmem:[%s6 + $0x40] sm:$0xff]
    %v580 = vld [vmem:[%s6 + $0x48] sm:$0xff]
    %v581 = vld [vmem:[%s6 + $0x50] sm:$0xff]
    %v582 = vld [vmem:[%s6 + $0x58] sm:$0xff]
    %v583 = vld [vmem:[%s6 + $0x60] sm:$0xff]
    %v584 = vld [vmem:[%s6 + $0x68] sm:$0xff]
    %v585 = vld [vmem:[%s6 + $0x70] sm:$0xff]
    %v586 = vld [vmem:[%s6 + $0x78] sm:$0xff]
    %v587 = vld [vmem:[%s6 + $0x80] sm:$0xff]
    %v588 = vld [vmem:[%s6 + $0x88] sm:$0xff]
    %v589 = vld [vmem:[%s6 + $0x90] sm:$0xff]
    %v590 = vld [vmem:[%s6 + $0x98] sm:$0xff]
    %v591 = vld [vmem:[%s6 + $0xa0] sm:$0xff]
    %v592 = vld [vmem:[%s6 + $0xa8] sm:$0xff]
    %v593 = vld [vmem:[%s6 + $0xb0] sm:$0xff]
    %v594 = vld [vmem:[%s6 + $0xb8] sm:$0xff]
    %v595 = vld [vmem:[%s6 + $0xc0] sm:$0xff]
    %v596 = vld [vmem:[%s6 + $0xc8] sm:$0xff]
    %v597 = vld [vmem:[%s6 + $0xd0] sm:$0xff]
    %v598 = vld [vmem:[%s6 + $0xd8] sm:$0xff]
    %v599 = vld [vmem:[%s6 + $0xe0] sm:$0xff]
    %v600 = vld [vmem:[%s6 + $0xe8] sm:$0xff]
    %v601 = vld [vmem:[%s6 + $0xf0] sm:$0xff]
    %v602 = vld [vmem:[%s6 + $0xf8] sm:$0xff]
    %v603 = vld [vmem:[%s7] sm:$0x3]
    %v605 = vlaneseq
    %v606 = vshrl.u32 %v605, 7
    %v607 = vsub.s32 0, %v606
    %v608 = vrot.slane %v603, %v607
    %v609 = vlaneseq
    %v610 = vshrl.u32 %v609, 7
    %v611 = vsub.s32 1, %v610
    %v612 = vrot.slane %v603, %v611
    %v647 = vunpack.c.l.b16 %v571
    %v648 = vunpack.c.h.b16 %v571
    %v649 = vunpack.c.l.b16 %v572
    %v650 = vunpack.c.h.b16 %v572
    %v651 = vunpack.c.l.b16 %v573
    %v652 = vunpack.c.h.b16 %v573
    %v653 = vunpack.c.l.b16 %v574
    %v654 = vunpack.c.h.b16 %v574
    %v655 = vunpack.c.l.b16 %v575
    %v656 = vunpack.c.h.b16 %v575
    %v657 = vunpack.c.l.b16 %v576
    %v658 = vunpack.c.h.b16 %v576
    %v659 = vunpack.c.l.b16 %v577
    %v660 = vunpack.c.h.b16 %v577
    %v661 = vunpack.c.l.b16 %v578
    %v662 = vunpack.c.h.b16 %v578
    %v663 = vunpack.c.l.b16 %v579
    %v664 = vunpack.c.h.b16 %v579
    %v665 = vunpack.c.l.b16 %v580
    %v666 = vunpack.c.h.b16 %v580
    %v667 = vunpack.c.l.b16 %v581
    %v668 = vunpack.c.h.b16 %v581
    %v669 = vunpack.c.l.b16 %v582
    %v670 = vunpack.c.h.b16 %v582
    %v671 = vunpack.c.l.b16 %v583
    %v672 = vunpack.c.h.b16 %v583
    %v673 = vunpack.c.l.b16 %v584
    %v674 = vunpack.c.h.b16 %v584
    %v675 = vunpack.c.l.b16 %v585
    %v676 = vunpack.c.h.b16 %v585
    %v677 = vunpack.c.l.b16 %v586
    %v678 = vunpack.c.h.b16 %v586
    %v679 = vunpack.c.l.b16 %v587
    %v680 = vunpack.c.h.b16 %v587
    %v681 = vunpack.c.l.b16 %v588
    %v682 = vunpack.c.h.b16 %v588
    %v683 = vunpack.c.l.b16 %v589
    %v684 = vunpack.c.h.b16 %v589
    %v685 = vunpack.c.l.b16 %v590
    %v686 = vunpack.c.h.b16 %v590
    %v687 = vunpack.c.l.b16 %v591
    %v688 = vunpack.c.h.b16 %v591
    %v689 = vunpack.c.l.b16 %v592
    %v690 = vunpack.c.h.b16 %v592
    %v691 = vunpack.c.l.b16 %v593
    %v692 = vunpack.c.h.b16 %v593
    %v693 = vunpack.c.l.b16 %v594
    %v694 = vunpack.c.h.b16 %v594
    %v695 = vunpack.c.l.b16 %v595
    %v696 = vunpack.c.h.b16 %v595
    %v697 = vunpack.c.l.b16 %v596
    %v698 = vunpack.c.h.b16 %v596
    %v699 = vunpack.c.l.b16 %v597
    %v700 = vunpack.c.h.b16 %v597
    %v701 = vunpack.c.l.b16 %v598
    %v702 = vunpack.c.h.b16 %v598
    %v703 = vunpack.c.l.b16 %v599
    %v704 = vunpack.c.h.b16 %v599
    %v705 = vunpack.c.l.b16 %v600
    %v706 = vunpack.c.h.b16 %v600
    %v707 = vunpack.c.l.b16 %v601
    %v708 = vunpack.c.h.b16 %v601
    %v709 = vunpack.c.l.b16 %v602
    %v710 = vunpack.c.h.b16 %v602
    %v711 = vpack.c.b16 %v649, %v647
    %v712 = vpack.c.b16 %v650, %v648
    %v713 = vpack.c.b16 %v653, %v651
    %v714 = vpack.c.b16 %v654, %v652
    %v715 = vpack.c.b16 %v657, %v655
    %v716 = vpack.c.b16 %v658, %v656
    %v717 = vpack.c.b16 %v661, %v659
    %v718 = vpack.c.b16 %v662, %v660
    %v719 = vpack.c.b16 %v665, %v663
    %v720 = vpack.c.b16 %v666, %v664
    %v721 = vpack.c.b16 %v669, %v667
    %v722 = vpack.c.b16 %v670, %v668
    %v723 = vpack.c.b16 %v673, %v671
    %v724 = vpack.c.b16 %v674, %v672
    %v725 = vpack.c.b16 %v677, %v675
    %v726 = vpack.c.b16 %v678, %v676
    %v727 = vpack.c.b16 %v681, %v679
    %v728 = vpack.c.b16 %v682, %v680
    %v729 = vpack.c.b16 %v685, %v683
    %v730 = vpack.c.b16 %v686, %v684
    %v731 = vpack.c.b16 %v689, %v687
    %v732 = vpack.c.b16 %v690, %v688
    %v733 = vpack.c.b16 %v693, %v691
    %v734 = vpack.c.b16 %v694, %v692
    %v735 = vpack.c.b16 %v697, %v695
    %v736 = vpack.c.b16 %v698, %v696
    %v737 = vpack.c.b16 %v701, %v699
    %v738 = vpack.c.b16 %v702, %v700
    %v739 = vpack.c.b16 %v705, %v703
    %v740 = vpack.c.b16 %v706, %v704
    %v741 = vpack.c.b16 %v709, %v707
    %v742 = vpack.c.b16 %v710, %v708
    %775 = vmatprep.subr.bf16.mxu0 %v726
    %776 = vmatpush1.bf16.msra.mxu0 %v725
    %777 = vmatprep.subr.bf16.mxu0 %v724
    %778 = vmatpush1.bf16.msra.mxu0 %v723
    %779 = vmatprep.subr.bf16.mxu0 %v722
    %780 = vmatpush1.bf16.msra.mxu0 %v721
    %781 = vmatprep.subr.bf16.mxu0 %v720
    %782 = vmatpush1.bf16.msra.mxu0 %v719
    %783 = vmatprep.subr.bf16.mxu0 %v718
    %784 = vmatpush1.bf16.msra.mxu0 %v717
    %785 = vmatprep.subr.bf16.mxu0 %v716
    %786 = vmatpush1.bf16.msra.mxu0 %v715
    %787 = vmatprep.subr.bf16.mxu0 %v714
    %788 = vmatpush1.bf16.msra.mxu0 %v713
    %789 = vmatprep.subr.bf16.mxu0 %v712
    %790 = vmatpush1.bf16.msra.mxu0 %v711
    %791 = vmatprep.subr.bf16.mxu0 %v742
    %792 = vmatpush2.bf16.msra.mxu0 %v741
    %793 = vmatprep.subr.bf16.mxu0 %v740
    %794 = vmatpush2.bf16.msra.mxu0 %v739
    %795 = vmatprep.subr.bf16.mxu0 %v738
    %796 = vmatpush2.bf16.msra.mxu0 %v737
    %797 = vmatprep.subr.bf16.mxu0 %v736
    %798 = vmatpush2.bf16.msra.mxu0 %v735
    %799 = vmatprep.subr.bf16.mxu0 %v734
    %800 = vmatpush2.bf16.msra.mxu0 %v733
    %801 = vmatprep.subr.bf16.mxu0 %v732
    %802 = vmatpush2.bf16.msra.mxu0 %v731
    %803 = vmatprep.subr.bf16.mxu0 %v730
    %804 = vmatpush2.bf16.msra.mxu0 %v729
    %805 = vmatprep.subr.bf16.mxu0 %v728
    %806 = vmatpush2.bf16.msra.mxu0 %v727
    %807 = vmatprep.mubr.bf16.mxu0 %v54
    %808 = vmatmul.mubr.bf16.gmra.mxu0 %v53
    %v809 = vpop.f32.mrf.mxu0
    %v810 = vadd.f32 %v608, %v809
    %v811 = vpop.f32.mrf.mxu0
    %v812 = vadd.f32 %v612, %v811
    %v813 = vpop.f32.mrf.mxu0
    %v814 = vadd.f32 %v608, %v813
    %v815 = vpop.f32.mrf.mxu0
    %v816 = vadd.f32 %v612, %v815
    %817 = vdwg.mxu0
    %v818 = vmax.f32 %v810, 0.0
    %v819 = vmax.f32 %v812, 0.0
    %v820 = vmax.f32 %v814, 0.0
    %v821 = vmax.f32 %v816, 0.0
    %v822 = vpack.c.bf16 %v820, %v818
    %v823 = vpack.c.bf16 %v821, %v819
    %v824 = vld [vmem:[%s8] sm:$0xff]
    %v825 = vld [vmem:[%s8 + $0x8] sm:$0xff]
    %v826 = vld [vmem:[%s8 + $0x10] sm:$0xff]
    %v827 = vld [vmem:[%s8 + $0x18] sm:$0xff]
    %v828 = vld [vmem:[%s8 + $0x20] sm:$0xff]
    %v829 = vld [vmem:[%s8 + $0x28] sm:$0xff]
    %v830 = vld [vmem:[%s8 + $0x30] sm:$0xff]
    %v831 = vld [vmem:[%s8 + $0x38] sm:$0xff]
    %v832 = vld [vmem:[%s8 + $0x40] sm:$0xff]
    %v833 = vld [vmem:[%s8 + $0x48] sm:$0xff]
    %v834 = vld [vmem:[%s8 + $0x50] sm:$0xff]
    %v835 = vld [vmem:[%s8 + $0x58] sm:$0xff]
    %v836 = vld [vmem:[%s8 + $0x60] sm:$0xff]
    %v837 = vld [vmem:[%s8 + $0x68] sm:$0xff]
    %v838 = vld [vmem:[%s8 + $0x70] sm:$0xff]
    %v839 = vld [vmem:[%s8 + $0x78] sm:$0xff]
    %v840 = vld [vmem:[%s8 + $0x80] sm:$0xff]
    %v841 = vld [vmem:[%s8 + $0x88] sm:$0xff]
    %v842 = vld [vmem:[%s8 + $0x90] sm:$0xff]
    %v843 = vld [vmem:[%s8 + $0x98] sm:$0xff]
    %v844 = vld [vmem:[%s8 + $0xa0] sm:$0xff]
    %v845 = vld [vmem:[%s8 + $0xa8] sm:$0xff]
    %v846 = vld [vmem:[%s8 + $0xb0] sm:$0xff]
    %v847 = vld [vmem:[%s8 + $0xb8] sm:$0xff]
    %v848 = vld [vmem:[%s8 + $0xc0] sm:$0xff]
    %v849 = vld [vmem:[%s8 + $0xc8] sm:$0xff]
    %v850 = vld [vmem:[%s8 + $0xd0] sm:$0xff]
    %v851 = vld [vmem:[%s8 + $0xd8] sm:$0xff]
    %v852 = vld [vmem:[%s8 + $0xe0] sm:$0xff]
    %v853 = vld [vmem:[%s8 + $0xe8] sm:$0xff]
    %v854 = vld [vmem:[%s8 + $0xf0] sm:$0xff]
    %v855 = vld [vmem:[%s8 + $0xf8] sm:$0xff]
    %v856 = vld [vmem:[%s9] sm:$0x3]
    %v858 = vlaneseq
    %v859 = vshrl.u32 %v858, 7
    %v860 = vsub.s32 0, %v859
    %v861 = vrot.slane %v856, %v860
    %v862 = vlaneseq
    %v863 = vshrl.u32 %v862, 7
    %v864 = vsub.s32 1, %v863
    %v865 = vrot.slane %v856, %v864
    %v900 = vunpack.c.l.b16 %v824
    %v901 = vunpack.c.h.b16 %v824
    %v902 = vunpack.c.l.b16 %v825
    %v903 = vunpack.c.h.b16 %v825
    %v904 = vunpack.c.l.b16 %v826
    %v905 = vunpack.c.h.b16 %v826
    %v906 = vunpack.c.l.b16 %v827
    %v907 = vunpack.c.h.b16 %v827
    %v908 = vunpack.c.l.b16 %v828
    %v909 = vunpack.c.h.b16 %v828
    %v910 = vunpack.c.l.b16 %v829
    %v911 = vunpack.c.h.b16 %v829
    %v912 = vunpack.c.l.b16 %v830
    %v913 = vunpack.c.h.b16 %v830
    %v914 = vunpack.c.l.b16 %v831
    %v915 = vunpack.c.h.b16 %v831
    %v916 = vunpack.c.l.b16 %v832
    %v917 = vunpack.c.h.b16 %v832
    %v918 = vunpack.c.l.b16 %v833
    %v919 = vunpack.c.h.b16 %v833
    %v920 = vunpack.c.l.b16 %v834
    %v921 = vunpack.c.h.b16 %v834
    %v922 = vunpack.c.l.b16 %v835
    %v923 = vunpack.c.h.b16 %v835
    %v924 = vunpack.c.l.b16 %v836
    %v925 = vunpack.c.h.b16 %v836
    %v926 = vunpack.c.l.b16 %v837
    %v927 = vunpack.c.h.b16 %v837
    %v928 = vunpack.c.l.b16 %v838
    %v929 = vunpack.c.h.b16 %v838
    %v930 = vunpack.c.l.b16 %v839
    %v931 = vunpack.c.h.b16 %v839
    %v932 = vunpack.c.l.b16 %v840
    %v933 = vunpack.c.h.b16 %v840
    %v934 = vunpack.c.l.b16 %v841
    %v935 = vunpack.c.h.b16 %v841
    %v936 = vunpack.c.l.b16 %v842
    %v937 = vunpack.c.h.b16 %v842
    %v938 = vunpack.c.l.b16 %v843
    %v939 = vunpack.c.h.b16 %v843
    %v940 = vunpack.c.l.b16 %v844
    %v941 = vunpack.c.h.b16 %v844
    %v942 = vunpack.c.l.b16 %v845
    %v943 = vunpack.c.h.b16 %v845
    %v944 = vunpack.c.l.b16 %v846
    %v945 = vunpack.c.h.b16 %v846
    %v946 = vunpack.c.l.b16 %v847
    %v947 = vunpack.c.h.b16 %v847
    %v948 = vunpack.c.l.b16 %v848
    %v949 = vunpack.c.h.b16 %v848
    %v950 = vunpack.c.l.b16 %v849
    %v951 = vunpack.c.h.b16 %v849
    %v952 = vunpack.c.l.b16 %v850
    %v953 = vunpack.c.h.b16 %v850
    %v954 = vunpack.c.l.b16 %v851
    %v955 = vunpack.c.h.b16 %v851
    %v956 = vunpack.c.l.b16 %v852
    %v957 = vunpack.c.h.b16 %v852
    %v958 = vunpack.c.l.b16 %v853
    %v959 = vunpack.c.h.b16 %v853
    %v960 = vunpack.c.l.b16 %v854
    %v961 = vunpack.c.h.b16 %v854
    %v962 = vunpack.c.l.b16 %v855
    %v963 = vunpack.c.h.b16 %v855
    %v964 = vpack.c.b16 %v902, %v900
    %v965 = vpack.c.b16 %v903, %v901
    %v966 = vpack.c.b16 %v906, %v904
    %v967 = vpack.c.b16 %v907, %v905
    %v968 = vpack.c.b16 %v910, %v908
    %v969 = vpack.c.b16 %v911, %v909
    %v970 = vpack.c.b16 %v914, %v912
    %v971 = vpack.c.b16 %v915, %v913
    %v972 = vpack.c.b16 %v918, %v916
    %v973 = vpack.c.b16 %v919, %v917
    %v974 = vpack.c.b16 %v922, %v920
    %v975 = vpack.c.b16 %v923, %v921
    %v976 = vpack.c.b16 %v926, %v924
    %v977 = vpack.c.b16 %v927, %v925
    %v978 = vpack.c.b16 %v930, %v928
    %v979 = vpack.c.b16 %v931, %v929
    %v980 = vpack.c.b16 %v934, %v932
    %v981 = vpack.c.b16 %v935, %v933
    %v982 = vpack.c.b16 %v938, %v936
    %v983 = vpack.c.b16 %v939, %v937
    %v984 = vpack.c.b16 %v942, %v940
    %v985 = vpack.c.b16 %v943, %v941
    %v986 = vpack.c.b16 %v946, %v944
    %v987 = vpack.c.b16 %v947, %v945
    %v988 = vpack.c.b16 %v950, %v948
    %v989 = vpack.c.b16 %v951, %v949
    %v990 = vpack.c.b16 %v954, %v952
    %v991 = vpack.c.b16 %v955, %v953
    %v992 = vpack.c.b16 %v958, %v956
    %v993 = vpack.c.b16 %v959, %v957
    %v994 = vpack.c.b16 %v962, %v960
    %v995 = vpack.c.b16 %v963, %v961
    %1028 = vmatprep.subr.bf16.mxu0 %v979
    %1029 = vmatpush1.bf16.msra.mxu0 %v978
    %1030 = vmatprep.subr.bf16.mxu0 %v977
    %1031 = vmatpush1.bf16.msra.mxu0 %v976
    %1032 = vmatprep.subr.bf16.mxu0 %v975
    %1033 = vmatpush1.bf16.msra.mxu0 %v974
    %1034 = vmatprep.subr.bf16.mxu0 %v973
    %1035 = vmatpush1.bf16.msra.mxu0 %v972
    %1036 = vmatprep.subr.bf16.mxu0 %v971
    %1037 = vmatpush1.bf16.msra.mxu0 %v970
    %1038 = vmatprep.subr.bf16.mxu0 %v969
    %1039 = vmatpush1.bf16.msra.mxu0 %v968
    %1040 = vmatprep.subr.bf16.mxu0 %v967
    %1041 = vmatpush1.bf16.msra.mxu0 %v966
    %1042 = vmatprep.subr.bf16.mxu0 %v965
    %1043 = vmatpush1.bf16.msra.mxu0 %v964
    %1044 = vmatprep.subr.bf16.mxu0 %v995
    %1045 = vmatpush2.bf16.msra.mxu0 %v994
    %1046 = vmatprep.subr.bf16.mxu0 %v993
    %1047 = vmatpush2.bf16.msra.mxu0 %v992
    %1048 = vmatprep.subr.bf16.mxu0 %v991
    %1049 = vmatpush2.bf16.msra.mxu0 %v990
    %1050 = vmatprep.subr.bf16.mxu0 %v989
    %1051 = vmatpush2.bf16.msra.mxu0 %v988
    %1052 = vmatprep.subr.bf16.mxu0 %v987
    %1053 = vmatpush2.bf16.msra.mxu0 %v986
    %1054 = vmatprep.subr.bf16.mxu0 %v985
    %1055 = vmatpush2.bf16.msra.mxu0 %v984
    %1056 = vmatprep.subr.bf16.mxu0 %v983
    %1057 = vmatpush2.bf16.msra.mxu0 %v982
    %1058 = vmatprep.subr.bf16.mxu0 %v981
    %1059 = vmatpush2.bf16.msra.mxu0 %v980
    %1060 = vmatprep.mubr.bf16.mxu0 %v823
    %1061 = vmatmul.mubr.bf16.gmra.mxu0 %v822
    %v1062 = vpop.f32.mrf.mxu0
    %v1063 = vadd.f32 %v861, %v1062
    %v1064 = vpop.f32.mrf.mxu0
    %v1065 = vadd.f32 %v865, %v1064
    %v1066 = vpop.f32.mrf.mxu0
    %v1067 = vadd.f32 %v861, %v1066
    %v1068 = vpop.f32.mrf.mxu0
    %v1069 = vadd.f32 %v865, %v1068
    %1070 = vdwg.mxu0
    %v1071 = vmul.f32 %v1063, %v49
    %v1072 = vmul.f32 %v1065, %v50
    %v1073 = vmul.f32 %v1067, %v51
    %v1074 = vmul.f32 %v1069, %v52
    %v1075 = vadd.f32 %v1071, %v1072
    %1076 = vadd.xlane.f32.xlu0 %v1075
    %v1077 = vpop.xlane.xlu0 %1076
    %v1078 = vadd.f32 %v1073, %v1074
    %1079 = vadd.xlane.f32.xlu0 %v1078
    %v1080 = vpop.xlane.xlu0 %1079
    %v1081 = vtanh.pop %v1077
    %v1082 = vtanh.pop %v1080
    %v1083 = vadd.f32 %v1081, 1.0
    %v1084 = vadd.f32 %v1082, 1.0
    %v1085 = vld [vmem:[%s10] sm:$0xff]
    %v1086 = vld [vmem:[%s10 + $0x8] sm:$0xff]
    %v1087 = vld [vmem:[%s10 + $0x10] sm:$0xff]
    %v1088 = vld [vmem:[%s10 + $0x18] sm:$0xff]
    %v1089 = vld [vmem:[%s10 + $0x20] sm:$0xff]
    %v1090 = vld [vmem:[%s10 + $0x28] sm:$0xff]
    %v1091 = vld [vmem:[%s10 + $0x30] sm:$0xff]
    %v1092 = vld [vmem:[%s10 + $0x38] sm:$0xff]
    %v1093 = vld [vmem:[%s10 + $0x40] sm:$0xff]
    %v1094 = vld [vmem:[%s10 + $0x48] sm:$0xff]
    %v1095 = vld [vmem:[%s10 + $0x50] sm:$0xff]
    %v1096 = vld [vmem:[%s10 + $0x58] sm:$0xff]
    %v1097 = vld [vmem:[%s10 + $0x60] sm:$0xff]
    %v1098 = vld [vmem:[%s10 + $0x68] sm:$0xff]
    %v1099 = vld [vmem:[%s10 + $0x70] sm:$0xff]
    %v1100 = vld [vmem:[%s10 + $0x78] sm:$0xff]
    %v1101 = vld [vmem:[%s10 + $0x80] sm:$0xff]
    %v1102 = vld [vmem:[%s10 + $0x88] sm:$0xff]
    %v1103 = vld [vmem:[%s10 + $0x90] sm:$0xff]
    %v1104 = vld [vmem:[%s10 + $0x98] sm:$0xff]
    %v1105 = vld [vmem:[%s10 + $0xa0] sm:$0xff]
    %v1106 = vld [vmem:[%s10 + $0xa8] sm:$0xff]
    %v1107 = vld [vmem:[%s10 + $0xb0] sm:$0xff]
    %v1108 = vld [vmem:[%s10 + $0xb8] sm:$0xff]
    %v1109 = vld [vmem:[%s10 + $0xc0] sm:$0xff]
    %v1110 = vld [vmem:[%s10 + $0xc8] sm:$0xff]
    %v1111 = vld [vmem:[%s10 + $0xd0] sm:$0xff]
    %v1112 = vld [vmem:[%s10 + $0xd8] sm:$0xff]
    %v1113 = vld [vmem:[%s10 + $0xe0] sm:$0xff]
    %v1114 = vld [vmem:[%s10 + $0xe8] sm:$0xff]
    %v1115 = vld [vmem:[%s10 + $0xf0] sm:$0xff]
    %v1116 = vld [vmem:[%s10 + $0xf8] sm:$0xff]
    %v1149 = vunpack.c.l.b16 %v1085
    %v1150 = vunpack.c.h.b16 %v1085
    %v1151 = vunpack.c.l.b16 %v1086
    %v1152 = vunpack.c.h.b16 %v1086
    %v1153 = vunpack.c.l.b16 %v1087
    %v1154 = vunpack.c.h.b16 %v1087
    %v1155 = vunpack.c.l.b16 %v1088
    %v1156 = vunpack.c.h.b16 %v1088
    %v1157 = vunpack.c.l.b16 %v1089
    %v1158 = vunpack.c.h.b16 %v1089
    %v1159 = vunpack.c.l.b16 %v1090
    %v1160 = vunpack.c.h.b16 %v1090
    %v1161 = vunpack.c.l.b16 %v1091
    %v1162 = vunpack.c.h.b16 %v1091
    %v1163 = vunpack.c.l.b16 %v1092
    %v1164 = vunpack.c.h.b16 %v1092
    %v1165 = vunpack.c.l.b16 %v1093
    %v1166 = vunpack.c.h.b16 %v1093
    %v1167 = vunpack.c.l.b16 %v1094
    %v1168 = vunpack.c.h.b16 %v1094
    %v1169 = vunpack.c.l.b16 %v1095
    %v1170 = vunpack.c.h.b16 %v1095
    %v1171 = vunpack.c.l.b16 %v1096
    %v1172 = vunpack.c.h.b16 %v1096
    %v1173 = vunpack.c.l.b16 %v1097
    %v1174 = vunpack.c.h.b16 %v1097
    %v1175 = vunpack.c.l.b16 %v1098
    %v1176 = vunpack.c.h.b16 %v1098
    %v1177 = vunpack.c.l.b16 %v1099
    %v1178 = vunpack.c.h.b16 %v1099
    %v1179 = vunpack.c.l.b16 %v1100
    %v1180 = vunpack.c.h.b16 %v1100
    %v1181 = vunpack.c.l.b16 %v1101
    %v1182 = vunpack.c.h.b16 %v1101
    %v1183 = vunpack.c.l.b16 %v1102
    %v1184 = vunpack.c.h.b16 %v1102
    %v1185 = vunpack.c.l.b16 %v1103
    %v1186 = vunpack.c.h.b16 %v1103
    %v1187 = vunpack.c.l.b16 %v1104
    %v1188 = vunpack.c.h.b16 %v1104
    %v1189 = vunpack.c.l.b16 %v1105
    %v1190 = vunpack.c.h.b16 %v1105
    %v1191 = vunpack.c.l.b16 %v1106
    %v1192 = vunpack.c.h.b16 %v1106
    %v1193 = vunpack.c.l.b16 %v1107
    %v1194 = vunpack.c.h.b16 %v1107
    %v1195 = vunpack.c.l.b16 %v1108
    %v1196 = vunpack.c.h.b16 %v1108
    %v1197 = vunpack.c.l.b16 %v1109
    %v1198 = vunpack.c.h.b16 %v1109
    %v1199 = vunpack.c.l.b16 %v1110
    %v1200 = vunpack.c.h.b16 %v1110
    %v1201 = vunpack.c.l.b16 %v1111
    %v1202 = vunpack.c.h.b16 %v1111
    %v1203 = vunpack.c.l.b16 %v1112
    %v1204 = vunpack.c.h.b16 %v1112
    %v1205 = vunpack.c.l.b16 %v1113
    %v1206 = vunpack.c.h.b16 %v1113
    %v1207 = vunpack.c.l.b16 %v1114
    %v1208 = vunpack.c.h.b16 %v1114
    %v1209 = vunpack.c.l.b16 %v1115
    %v1210 = vunpack.c.h.b16 %v1115
    %v1211 = vunpack.c.l.b16 %v1116
    %v1212 = vunpack.c.h.b16 %v1116
    %v1213 = vpack.c.b16 %v1151, %v1149
    %v1214 = vpack.c.b16 %v1152, %v1150
    %v1215 = vpack.c.b16 %v1155, %v1153
    %v1216 = vpack.c.b16 %v1156, %v1154
    %v1217 = vpack.c.b16 %v1159, %v1157
    %v1218 = vpack.c.b16 %v1160, %v1158
    %v1219 = vpack.c.b16 %v1163, %v1161
    %v1220 = vpack.c.b16 %v1164, %v1162
    %v1221 = vpack.c.b16 %v1167, %v1165
    %v1222 = vpack.c.b16 %v1168, %v1166
    %v1223 = vpack.c.b16 %v1171, %v1169
    %v1224 = vpack.c.b16 %v1172, %v1170
    %v1225 = vpack.c.b16 %v1175, %v1173
    %v1226 = vpack.c.b16 %v1176, %v1174
    %v1227 = vpack.c.b16 %v1179, %v1177
    %v1228 = vpack.c.b16 %v1180, %v1178
    %v1229 = vpack.c.b16 %v1183, %v1181
    %v1230 = vpack.c.b16 %v1184, %v1182
    %v1231 = vpack.c.b16 %v1187, %v1185
    %v1232 = vpack.c.b16 %v1188, %v1186
    %v1233 = vpack.c.b16 %v1191, %v1189
    %v1234 = vpack.c.b16 %v1192, %v1190
    %v1235 = vpack.c.b16 %v1195, %v1193
    %v1236 = vpack.c.b16 %v1196, %v1194
    %v1237 = vpack.c.b16 %v1199, %v1197
    %v1238 = vpack.c.b16 %v1200, %v1198
    %v1239 = vpack.c.b16 %v1203, %v1201
    %v1240 = vpack.c.b16 %v1204, %v1202
    %v1241 = vpack.c.b16 %v1207, %v1205
    %v1242 = vpack.c.b16 %v1208, %v1206
    %v1243 = vpack.c.b16 %v1211, %v1209
    %v1244 = vpack.c.b16 %v1212, %v1210
    %1277 = vmatprep.subr.bf16.mxu0 %v1228
    %1278 = vmatpush1.bf16.msra.mxu0 %v1227
    %1279 = vmatprep.subr.bf16.mxu0 %v1226
    %1280 = vmatpush1.bf16.msra.mxu0 %v1225
    %1281 = vmatprep.subr.bf16.mxu0 %v1224
    %1282 = vmatpush1.bf16.msra.mxu0 %v1223
    %1283 = vmatprep.subr.bf16.mxu0 %v1222
    %1284 = vmatpush1.bf16.msra.mxu0 %v1221
    %1285 = vmatprep.subr.bf16.mxu0 %v1220
    %1286 = vmatpush1.bf16.msra.mxu0 %v1219
    %1287 = vmatprep.subr.bf16.mxu0 %v1218
    %1288 = vmatpush1.bf16.msra.mxu0 %v1217
    %1289 = vmatprep.subr.bf16.mxu0 %v1216
    %1290 = vmatpush1.bf16.msra.mxu0 %v1215
    %1291 = vmatprep.subr.bf16.mxu0 %v1214
    %1292 = vmatpush1.bf16.msra.mxu0 %v1213
    %1293 = vmatprep.subr.bf16.mxu0 %v1244
    %1294 = vmatpush2.bf16.msra.mxu0 %v1243
    %1295 = vmatprep.subr.bf16.mxu0 %v1242
    %1296 = vmatpush2.bf16.msra.mxu0 %v1241
    %1297 = vmatprep.subr.bf16.mxu0 %v1240
    %1298 = vmatpush2.bf16.msra.mxu0 %v1239
    %1299 = vmatprep.subr.bf16.mxu0 %v1238
    %1300 = vmatpush2.bf16.msra.mxu0 %v1237
    %1301 = vmatprep.subr.bf16.mxu0 %v1236
    %1302 = vmatpush2.bf16.msra.mxu0 %v1235
    %1303 = vmatprep.subr.bf16.mxu0 %v1234
    %1304 = vmatpush2.bf16.msra.mxu0 %v1233
    %1305 = vmatprep.subr.bf16.mxu0 %v1232
    %1306 = vmatpush2.bf16.msra.mxu0 %v1231
    %1307 = vmatprep.subr.bf16.mxu0 %v1230
    %1308 = vmatpush2.bf16.msra.mxu0 %v1229
    %1309 = vmatprep.mubr.bf16.mxu0 %v54
    %1310 = vmatmul.mubr.bf16.gmra.mxu0 %v53
    %v1311 = vpop.f32.mrf.mxu0
    %v1312 = vadd.f32 0.0, %v1311
    %v1313 = vpop.f32.mrf.mxu0
    %v1314 = vadd.f32 0.0, %v1313
    %v1315 = vpop.f32.mrf.mxu0
    %v1316 = vadd.f32 0.0, %v1315
    %v1317 = vpop.f32.mrf.mxu0
    %v1318 = vadd.f32 0.0, %v1317
    %1319 = vdwg.mxu0
    %v1320 = vmul.f32 %v569, %v1312
    %v1321 = vmul.f32 %v569, %v1314
    %v1322 = vmul.f32 %v570, %v1316
    %v1323 = vmul.f32 %v570, %v1318
    %v1324 = vld [vmem:[%s11] sm:$0xff]
    %v1325 = vld [vmem:[%s11 + $0x8] sm:$0xff]
    %v1326 = vld [vmem:[%s11 + $0x10] sm:$0xff]
    %v1327 = vld [vmem:[%s11 + $0x18] sm:$0xff]
    %v1328 = vld [vmem:[%s11 + $0x20] sm:$0xff]
    %v1329 = vld [vmem:[%s11 + $0x28] sm:$0xff]
    %v1330 = vld [vmem:[%s11 + $0x30] sm:$0xff]
    %v1331 = vld [vmem:[%s11 + $0x38] sm:$0xff]
    %v1332 = vld [vmem:[%s11 + $0x40] sm:$0xff]
    %v1333 = vld [vmem:[%s11 + $0x48] sm:$0xff]
    %v1334 = vld [vmem:[%s11 + $0x50] sm:$0xff]
    %v1335 = vld [vmem:[%s11 + $0x58] sm:$0xff]
    %v1336 = vld [vmem:[%s11 + $0x60] sm:$0xff]
    %v1337 = vld [vmem:[%s11 + $0x68] sm:$0xff]
    %v1338 = vld [vmem:[%s11 + $0x70] sm:$0xff]
    %v1339 = vld [vmem:[%s11 + $0x78] sm:$0xff]
    %v1340 = vld [vmem:[%s11 + $0x80] sm:$0xff]
    %v1341 = vld [vmem:[%s11 + $0x88] sm:$0xff]
    %v1342 = vld [vmem:[%s11 + $0x90] sm:$0xff]
    %v1343 = vld [vmem:[%s11 + $0x98] sm:$0xff]
    %v1344 = vld [vmem:[%s11 + $0xa0] sm:$0xff]
    %v1345 = vld [vmem:[%s11 + $0xa8] sm:$0xff]
    %v1346 = vld [vmem:[%s11 + $0xb0] sm:$0xff]
    %v1347 = vld [vmem:[%s11 + $0xb8] sm:$0xff]
    %v1348 = vld [vmem:[%s11 + $0xc0] sm:$0xff]
    %v1349 = vld [vmem:[%s11 + $0xc8] sm:$0xff]
    %v1350 = vld [vmem:[%s11 + $0xd0] sm:$0xff]
    %v1351 = vld [vmem:[%s11 + $0xd8] sm:$0xff]
    %v1352 = vld [vmem:[%s11 + $0xe0] sm:$0xff]
    %v1353 = vld [vmem:[%s11 + $0xe8] sm:$0xff]
    %v1354 = vld [vmem:[%s11 + $0xf0] sm:$0xff]
    %v1355 = vld [vmem:[%s11 + $0xf8] sm:$0xff]
    %v1388 = vunpack.c.l.b16 %v1324
    %v1389 = vunpack.c.h.b16 %v1324
    %v1390 = vunpack.c.l.b16 %v1325
    %v1391 = vunpack.c.h.b16 %v1325
    %v1392 = vunpack.c.l.b16 %v1326
    %v1393 = vunpack.c.h.b16 %v1326
    %v1394 = vunpack.c.l.b16 %v1327
    %v1395 = vunpack.c.h.b16 %v1327
    %v1396 = vunpack.c.l.b16 %v1328
    %v1397 = vunpack.c.h.b16 %v1328
    %v1398 = vunpack.c.l.b16 %v1329
    %v1399 = vunpack.c.h.b16 %v1329
    %v1400 = vunpack.c.l.b16 %v1330
    %v1401 = vunpack.c.h.b16 %v1330
    %v1402 = vunpack.c.l.b16 %v1331
    %v1403 = vunpack.c.h.b16 %v1331
    %v1404 = vunpack.c.l.b16 %v1332
    %v1405 = vunpack.c.h.b16 %v1332
    %v1406 = vunpack.c.l.b16 %v1333
    %v1407 = vunpack.c.h.b16 %v1333
    %v1408 = vunpack.c.l.b16 %v1334
    %v1409 = vunpack.c.h.b16 %v1334
    %v1410 = vunpack.c.l.b16 %v1335
    %v1411 = vunpack.c.h.b16 %v1335
    %v1412 = vunpack.c.l.b16 %v1336
    %v1413 = vunpack.c.h.b16 %v1336
    %v1414 = vunpack.c.l.b16 %v1337
    %v1415 = vunpack.c.h.b16 %v1337
    %v1416 = vunpack.c.l.b16 %v1338
    %v1417 = vunpack.c.h.b16 %v1338
    %v1418 = vunpack.c.l.b16 %v1339
    %v1419 = vunpack.c.h.b16 %v1339
    %v1420 = vunpack.c.l.b16 %v1340
    %v1421 = vunpack.c.h.b16 %v1340
    %v1422 = vunpack.c.l.b16 %v1341
    %v1423 = vunpack.c.h.b16 %v1341
    %v1424 = vunpack.c.l.b16 %v1342
    %v1425 = vunpack.c.h.b16 %v1342
    %v1426 = vunpack.c.l.b16 %v1343
    %v1427 = vunpack.c.h.b16 %v1343
    %v1428 = vunpack.c.l.b16 %v1344
    %v1429 = vunpack.c.h.b16 %v1344
    %v1430 = vunpack.c.l.b16 %v1345
    %v1431 = vunpack.c.h.b16 %v1345
    %v1432 = vunpack.c.l.b16 %v1346
    %v1433 = vunpack.c.h.b16 %v1346
    %v1434 = vunpack.c.l.b16 %v1347
    %v1435 = vunpack.c.h.b16 %v1347
    %v1436 = vunpack.c.l.b16 %v1348
    %v1437 = vunpack.c.h.b16 %v1348
    %v1438 = vunpack.c.l.b16 %v1349
    %v1439 = vunpack.c.h.b16 %v1349
    %v1440 = vunpack.c.l.b16 %v1350
    %v1441 = vunpack.c.h.b16 %v1350
    %v1442 = vunpack.c.l.b16 %v1351
    %v1443 = vunpack.c.h.b16 %v1351
    %v1444 = vunpack.c.l.b16 %v1352
    %v1445 = vunpack.c.h.b16 %v1352
    %v1446 = vunpack.c.l.b16 %v1353
    %v1447 = vunpack.c.h.b16 %v1353
    %v1448 = vunpack.c.l.b16 %v1354
    %v1449 = vunpack.c.h.b16 %v1354
    %v1450 = vunpack.c.l.b16 %v1355
    %v1451 = vunpack.c.h.b16 %v1355
    %v1452 = vpack.c.b16 %v1390, %v1388
    %v1453 = vpack.c.b16 %v1391, %v1389
    %v1454 = vpack.c.b16 %v1394, %v1392
    %v1455 = vpack.c.b16 %v1395, %v1393
    %v1456 = vpack.c.b16 %v1398, %v1396
    %v1457 = vpack.c.b16 %v1399, %v1397
    %v1458 = vpack.c.b16 %v1402, %v1400
    %v1459 = vpack.c.b16 %v1403, %v1401
    %v1460 = vpack.c.b16 %v1406, %v1404
    %v1461 = vpack.c.b16 %v1407, %v1405
    %v1462 = vpack.c.b16 %v1410, %v1408
    %v1463 = vpack.c.b16 %v1411, %v1409
    %v1464 = vpack.c.b16 %v1414, %v1412
    %v1465 = vpack.c.b16 %v1415, %v1413
    %v1466 = vpack.c.b16 %v1418, %v1416
    %v1467 = vpack.c.b16 %v1419, %v1417
    %v1468 = vpack.c.b16 %v1422, %v1420
    %v1469 = vpack.c.b16 %v1423, %v1421
    %v1470 = vpack.c.b16 %v1426, %v1424
    %v1471 = vpack.c.b16 %v1427, %v1425
    %v1472 = vpack.c.b16 %v1430, %v1428
    %v1473 = vpack.c.b16 %v1431, %v1429
    %v1474 = vpack.c.b16 %v1434, %v1432
    %v1475 = vpack.c.b16 %v1435, %v1433
    %v1476 = vpack.c.b16 %v1438, %v1436
    %v1477 = vpack.c.b16 %v1439, %v1437
    %v1478 = vpack.c.b16 %v1442, %v1440
    %v1479 = vpack.c.b16 %v1443, %v1441
    %v1480 = vpack.c.b16 %v1446, %v1444
    %v1481 = vpack.c.b16 %v1447, %v1445
    %v1482 = vpack.c.b16 %v1450, %v1448
    %v1483 = vpack.c.b16 %v1451, %v1449
    %1516 = vmatprep.subr.bf16.mxu0 %v1467
    %1517 = vmatpush1.bf16.msra.mxu0 %v1466
    %1518 = vmatprep.subr.bf16.mxu0 %v1465
    %1519 = vmatpush1.bf16.msra.mxu0 %v1464
    %1520 = vmatprep.subr.bf16.mxu0 %v1463
    %1521 = vmatpush1.bf16.msra.mxu0 %v1462
    %1522 = vmatprep.subr.bf16.mxu0 %v1461
    %1523 = vmatpush1.bf16.msra.mxu0 %v1460
    %1524 = vmatprep.subr.bf16.mxu0 %v1459
    %1525 = vmatpush1.bf16.msra.mxu0 %v1458
    %1526 = vmatprep.subr.bf16.mxu0 %v1457
    %1527 = vmatpush1.bf16.msra.mxu0 %v1456
    %1528 = vmatprep.subr.bf16.mxu0 %v1455
    %1529 = vmatpush1.bf16.msra.mxu0 %v1454
    %1530 = vmatprep.subr.bf16.mxu0 %v1453
    %1531 = vmatpush1.bf16.msra.mxu0 %v1452
    %1532 = vmatprep.subr.bf16.mxu0 %v1483
    %1533 = vmatpush2.bf16.msra.mxu0 %v1482
    %1534 = vmatprep.subr.bf16.mxu0 %v1481
    %1535 = vmatpush2.bf16.msra.mxu0 %v1480
    %1536 = vmatprep.subr.bf16.mxu0 %v1479
    %1537 = vmatpush2.bf16.msra.mxu0 %v1478
    %1538 = vmatprep.subr.bf16.mxu0 %v1477
    %1539 = vmatpush2.bf16.msra.mxu0 %v1476
    %1540 = vmatprep.subr.bf16.mxu0 %v1475
    %1541 = vmatpush2.bf16.msra.mxu0 %v1474
    %1542 = vmatprep.subr.bf16.mxu0 %v1473
    %1543 = vmatpush2.bf16.msra.mxu0 %v1472
    %1544 = vmatprep.subr.bf16.mxu0 %v1471
    %1545 = vmatpush2.bf16.msra.mxu0 %v1470
    %1546 = vmatprep.subr.bf16.mxu0 %v1469
    %1547 = vmatpush2.bf16.msra.mxu0 %v1468
    %1548 = vmatprep.mubr.bf16.mxu0 %v56
    %1549 = vmatmul.mubr.bf16.gmra.mxu0 %v55
    %v1550 = vpop.f32.mrf.mxu0
    %v1551 = vadd.f32 0.0, %v1550
    %v1552 = vpop.f32.mrf.mxu0
    %v1553 = vadd.f32 0.0, %v1552
    %v1554 = vpop.f32.mrf.mxu0
    %v1555 = vadd.f32 0.0, %v1554
    %v1556 = vpop.f32.mrf.mxu0
    %v1557 = vadd.f32 0.0, %v1556
    %1558 = vdwg.mxu0
    %v1559 = vmul.f32 %v1083, %v1551
    %v1560 = vmul.f32 %v1083, %v1553
    %v1561 = vmul.f32 %v1084, %v1555
    %v1562 = vmul.f32 %v1084, %v1557
    %v1563 = vadd.f32 %v1320, %v1559
    %v1564 = vadd.f32 %v1321, %v1560
    %v1565 = vadd.f32 %v1322, %v1561
    %v1566 = vadd.f32 %v1323, %v1562
    %v1567 = vld [vmem:[%s12] sm:$0x3]
    %v1569 = vlaneseq
    %v1570 = vshrl.u32 %v1569, 7
    %v1571 = vsub.s32 0, %v1570
    %v1572 = vrot.slane %v1567, %v1571
    %v1573 = vlaneseq
    %v1574 = vshrl.u32 %v1573, 7
    %v1575 = vsub.s32 1, %v1574
    %v1576 = vrot.slane %v1567, %v1575
    %v1579 = vadd.f32 %v1563, %v1572
    %v1580 = vadd.f32 %v1564, %v1576
    %v1581 = vadd.f32 %v1565, %v1572
    %v1582 = vadd.f32 %v1566, %v1576
    %1583 = vst [vmem:[#allocation2] sm:$0xff] %v1579
    %1584 = vst [vmem:[#allocation2 + $0x8] sm:$0xff] %v1580
    %1585 = vst [vmem:[#allocation2 + $0x10] sm:$0xff] %v1581
    %1586 = vst [vmem:[#allocation2 + $0x18] sm:$0xff] %v1582
    // Predicated region
    $region54: #{cross_interaction.1} parent=1 // pred_check
      _
    $region55: #{cross_interaction.1} parent=1 // pred_check_branch
      %1588 = sbr.rel (0) target = $region57
    $region56: #{cross_interaction.1} parent=1 // pred_region
      %s1590 = ssub.s32 512, 512
      %1591 = vsyncadd [#allocation3], %s1590
      %s1592 = sshll.u32 [#allocation2], 4
      %s1593 = int_to_ptr.vmem [resolvable:$true] %s1592
      %1598 = dma.vmem_to_hbm [thread:$0]  %s1593, 512, %s13, [#allocation3], 256, 256, 16
    $region57: #{cross_interaction.1} parent=1 // pred_fallthru
      _
    // Predicated region
    $region58: #{cross_interaction.1} parent=1 // pred_check
      _
    $region59: #{cross_interaction.1} parent=1 // pred_check_branch
      %1600 = sbr.rel (0) target = $region61
    $region60: #{cross_interaction.1} parent=1 // pred_region
      %1601 = dma.done [#allocation3], 512
    $region61: #{cross_interaction.1} parent=1 // pred_fallthru
      _
    %1602 = vsyncpa [#allocation3], 1

</llo_original>
